<compile_context>
chip_gen: v6e
topology: v6e:2x2x1
jax: 0.10.0
libtpu: 0.0.40
codegen_flags: <defaults>
</compile_context>

<pallas_src>
import math
import functools

import jax
import jax.numpy as jnp
from jax import lax
from jax.experimental import pallas as pl
from jax.experimental.pallas import tpu as pltpu


# --------------------------------------------------------------------------
# helpers
# --------------------------------------------------------------------------

def _round_up(x, m):
    return ((x + m - 1) // m) * m


def _split_heads(x, h):
    b, s, d = x.shape
    return x.reshape(b, s, h, d // h).transpose(0, 2, 1, 3)


def _merge_heads(x):
    b, h, s, dh = x.shape
    return x.transpose(0, 2, 1, 3).reshape(b, s, h * dh)


def _rel_shift(x):
    """Music-Transformer relative shift (port of `shift` in the reference)."""
    *lead, i, j = x.shape
    x = jnp.concatenate([x, jnp.zeros((*lead, i, i), x.dtype)], axis=-1)
    l = i + j - 1
    flat = x.reshape(*lead, i * (i + j))
    pad = (-flat.shape[-1]) % l
    flat = jnp.concatenate([flat, jnp.zeros((*lead, pad), x.dtype)], axis=-1)
    shifted = flat.reshape(*lead, -1, l)
    return shifted[..., :i, i - 1:]


# --------------------------------------------------------------------------
# tiled matmul (+ bias) kernel : bf16 MXU inputs, f32 accumulation
# --------------------------------------------------------------------------

def _matmul_kernel(x_ref, w_ref, b_ref, o_ref, acc_ref):
    @pl.when(pl.program_id(2) == 0)
    def _():
        acc_ref[...] = jnp.zeros_like(acc_ref)

    acc_ref[...] += jnp.dot(x_ref[...].astype(jnp.bfloat16),
                            w_ref[...].astype(jnp.bfloat16),
                            preferred_element_type=jnp.float32)

    @pl.when(pl.program_id(2) == pl.num_programs(2) - 1)
    def _():
        o_ref[...] = (acc_ref[...] + b_ref[...].astype(jnp.float32)).astype(o_ref.dtype)


def matmul_bias(x, w, b, *, tm=256, tn=256, tk=512):
    """x:(M,K) f32, w:(K,N) f32, b:(N,) f32 -> (M,N) f32.

    Tiles sized for the smallest VMEM budget (v7x, 64 MiB): worst case
    2*(tm*tk + tk*tn)*4B double-buffered + acc ~= 3 MiB << 32 MiB scoped default.
    Dims are padded up to tile multiples (zero padding is exact for matmul).
    """
    m, k = x.shape
    n = w.shape[1]
    tm = min(tm, _round_up(m, 8))
    tn = min(tn, _round_up(n, 128))
    tk = min(tk, _round_up(k, 128))
    mp, np_, kp = _round_up(m, tm), _round_up(n, tn), _round_up(k, tk)
    if (mp, kp) != (m, k):
        x = jnp.pad(x, ((0, mp - m), (0, kp - k)))
    if (kp, np_) != (k, n):
        w = jnp.pad(w, ((0, kp - k), (0, np_ - n)))
    if np_ != n:
        b = jnp.pad(b, (0, np_ - n))

    out = pl.pallas_call(
        _matmul_kernel,
        out_shape=jax.ShapeDtypeStruct((mp, np_), jnp.float32),
        grid=(mp // tm, np_ // tn, kp // tk),
        in_specs=[pl.BlockSpec((tm, tk), lambda i, j, kk: (i, kk)),
                  pl.BlockSpec((tk, tn), lambda i, j, kk: (kk, j)),
                  pl.BlockSpec((1, tn), lambda i, j, kk: (0, j))],
        out_specs=pl.BlockSpec((tm, tn), lambda i, j, kk: (i, j)),
        scratch_shapes=[pltpu.VMEM((tm, tn), jnp.float32)],
        compiler_params=pltpu.CompilerParams(
            dimension_semantics=("parallel", "parallel", "arbitrary")),
    )(x, w, b.reshape(1, np_))
    if (mp, np_) != (m, n):
        out = out[:m, :n]
    return out


# --------------------------------------------------------------------------
# fused residual-add + LayerNorm kernel
# --------------------------------------------------------------------------

def _add_layernorm_kernel(x_ref, y_ref, g_ref, b_ref, o_ref, *, eps):
    x = x_ref[...].astype(jnp.float32) + y_ref[...].astype(jnp.float32)
    mu = jnp.mean(x, axis=-1, keepdims=True)
    var = jnp.mean(jnp.square(x - mu), axis=-1, keepdims=True)
    xn = (x - mu) * lax.rsqrt(var + eps)
    o_ref[...] = (xn * g_ref[...] + b_ref[...]).astype(o_ref.dtype)


def add_layernorm(x2, y2, g, b, *, eps=1e-5, tm=256):
    m, d = x2.shape
    tm = min(tm, _round_up(m, 8))
    mp = _round_up(m, tm)
    if mp != m:
        x2 = jnp.pad(x2, ((0, mp - m), (0, 0)))
        y2 = jnp.pad(y2, ((0, mp - m), (0, 0)))
    out = pl.pallas_call(
        functools.partial(_add_layernorm_kernel, eps=eps),
        out_shape=jax.ShapeDtypeStruct((mp, d), jnp.float32),
        grid=(mp // tm,),
        in_specs=[pl.BlockSpec((tm, d), lambda i: (i, 0)),
                  pl.BlockSpec((tm, d), lambda i: (i, 0)),
                  pl.BlockSpec((1, d), lambda i: (0, 0)),
                  pl.BlockSpec((1, d), lambda i: (0, 0))],
        out_specs=pl.BlockSpec((tm, d), lambda i: (i, 0)),
        compiler_params=pltpu.CompilerParams(dimension_semantics=("parallel",)),
    )(x2, y2, g.reshape(1, d), b.reshape(1, d))
    return out[:m] if mp != m else out


# --------------------------------------------------------------------------
# attention kernels
# --------------------------------------------------------------------------

def _attn_main_kernel(q_ref, k_ref, v_ref, qm_ref, km_ref, *rest,
                      scale, mem_total, has_bias):
    if has_bias:
        bias_ref, o_ref, w_ref = rest
    else:
        o_ref, w_ref = rest

    # scores: contract last dims directly (no k.T materialization), bf16 MXU inputs.
    s = lax.dot_general(q_ref[...].astype(jnp.bfloat16),
                        k_ref[...].astype(jnp.bfloat16),
                        (((1,), (1,)), ((), ())),
                        preferred_element_type=jnp.float32) * scale
    if has_bias:
        s = s + bias_ref[...].astype(jnp.float32)

    sq, tk = s.shape
    # mask built in-kernel: memory columns always attendable (F.pad value=True),
    # token columns/rows gated by the padding mask.
    col = lax.broadcasted_iota(jnp.int32, (sq, tk), 1)
    qm = qm_ref[...]                                    # (Sq, 1)
    km = km_ref[...]                                    # (1, Tk) (ones over memory cols)
    allow = jnp.where(col < mem_total, 1.0, qm) * km
    s = jnp.where(allow > 0.0, s, -1e9)

    mx = jnp.max(s, axis=-1, keepdims=True)
    e = jnp.exp(s - mx)
    denom = jnp.sum(e, axis=-1, keepdims=True)
    p = e * pl.reciprocal(denom, approx=True)           # divide on the EUP slot
    o = jnp.dot(p.astype(jnp.bfloat16), v_ref[...].astype(jnp.bfloat16),
                preferred_element_type=jnp.float32)
    o_ref[...] = o.astype(o_ref.dtype)
    w_ref[...] = p.astype(w_ref.dtype)


def attention_main(q, k, v, qmask, kmask, bias, *, mem_total):
    b, h, sq, dh = q.shape
    tk = k.shape[2]
    scale = dh ** -0.5
    has_bias = bias is not None
    kern = functools.partial(_attn_main_kernel, scale=scale,
                             mem_total=mem_total, has_bias=has_bias)
    in_specs = [
        pl.BlockSpec((None, None, sq, dh), lambda i, j: (i, j, 0, 0)),
        pl.BlockSpec((None, None, tk, dh), lambda i, j: (i, j, 0, 0)),
        pl.BlockSpec((None, None, tk, dh), lambda i, j: (i, j, 0, 0)),
        pl.BlockSpec((None, sq, 1), lambda i, j: (i, 0, 0)),
        pl.BlockSpec((None, 1, tk), lambda i, j: (i, 0, 0)),
    ]
    args = [q, k, v, qmask, kmask]
    if has_bias:
        in_specs.append(pl.BlockSpec((None, None, sq, tk), lambda i, j: (i, j, 0, 0)))
        args.append(bias)

    out, weights = pl.pallas_call(
        kern,
        out_shape=(jax.ShapeDtypeStruct((b, h, sq, dh), jnp.float32),
                   jax.ShapeDtypeStruct((b, h, sq, tk), jnp.float32)),
        grid=(b, h),
        in_specs=in_specs,
        out_specs=(pl.BlockSpec((None, None, sq, dh), lambda i, j: (i, j, 0, 0)),
                   pl.BlockSpec((None, None, sq, tk), lambda i, j: (i, j, 0, 0))),
        compiler_params=pltpu.CompilerParams(
            dimension_semantics=("parallel", "parallel")),
    )(*args)
    return out, weights


def _attn_aux_kernel(q_ref, k_ref, v_ref, o_ref, *, scale):
    s = lax.dot_general(q_ref[...].astype(jnp.bfloat16),
                        k_ref[...].astype(jnp.bfloat16),
                        (((1,), (1,)), ((), ())),
                        preferred_element_type=jnp.float32) * scale
    mx = jnp.max(s, axis=-1, keepdims=True)
    e = jnp.exp(s - mx)
    denom = jnp.sum(e, axis=-1, keepdims=True)
    p = e * pl.reciprocal(denom, approx=True)
    o = jnp.dot(p.astype(jnp.bfloat16), v_ref[...].astype(jnp.bfloat16),
                preferred_element_type=jnp.float32)
    o_ref[...] = o.astype(o_ref.dtype)


def attention_aux(q, k, v):
    b, h, sq, dh = q.shape
    sk = k.shape[2]
    scale = dh ** -0.5
    return pl.pallas_call(
        functools.partial(_attn_aux_kernel, scale=scale),
        out_shape=jax.ShapeDtypeStruct((b, h, sq, dh), jnp.float32),
        grid=(b, h),
        in_specs=[pl.BlockSpec((None, None, sq, dh), lambda i, j: (i, j, 0, 0)),
                  pl.BlockSpec((None, None, sk, dh), lambda i, j: (i, j, 0, 0)),
                  pl.BlockSpec((None, None, sk, dh), lambda i, j: (i, j, 0, 0))],
        out_specs=pl.BlockSpec((None, None, sq, dh), lambda i, j: (i, j, 0, 0)),
        compiler_params=pltpu.CompilerParams(
            dimension_semantics=("parallel", "parallel")),
    )(q, k, v)


# --------------------------------------------------------------------------
# MyMemoryAttention forward
# --------------------------------------------------------------------------

def my_memory_attention(x, memories, input_mask, pos_emb, params, *,
                        heads, seq_len, mem_len, cmem_len, cmem_ratio):
    b, s, d = x.shape
    dh = d // heads
    m, cm = memories
    mem = jnp.concatenate([cm, m, x], axis=1)           # (B, Tk, D)
    tk = mem.shape[1]
    mem_total = tk - s                                  # == cmem_len + mem_len here

    x2 = x.reshape(b * s, d)
    mem2 = mem.reshape(b * tk, d)
    zero_d = jnp.zeros((d,), jnp.float32)
    zero_2d = jnp.zeros((2 * d,), jnp.float32)

    # ---- main attention projections (nn.Linear, bias-free => x @ W^T); K|V fused ----
    q = matmul_bias(x2, params["wq"].T, zero_d).reshape(b, s, d)
    wkv_t = jnp.concatenate([params["wk"].T, params["wv"].T], axis=1)   # (D, 2D)
    kv = matmul_bias(mem2, wkv_t, zero_2d).reshape(b, tk, 2 * d)
    k, v = kv[..., :d], kv[..., d:]

    qh = _split_heads(q, heads)
    kh = _split_heads(k, heads)
    vh = _split_heads(v, heads)

    # ---- padding mask (2-D (B,S) form; memory columns are padded with True) ----
    if input_mask is None:
        qmask = jnp.ones((b, s, 1), jnp.float32)
        kmask = jnp.ones((b, 1, tk), jnp.float32)
    else:
        im = input_mask.astype(jnp.float32)             # (B, S)
        qmask = im[:, :, None]
        kmask = jnp.concatenate(
            [jnp.ones((b, 1, mem_total), jnp.float32), im[:, None, :]], axis=-1)

    # ---- relative positional bias (Music-Transformer shift), XLA glue ----
    if pos_emb is not None:
        pos_dots = jnp.einsum("bhid,hjd->bhij", qh, pos_emb) * (dh ** 0.5)
        bias = _rel_shift(pos_dots)[..., :tk]
    else:
        bias = None

    attn_out, weights = attention_main(qh, kh, vh, qmask, kmask, bias,
                                       mem_total=mem_total)

    a = matmul_bias(_merge_heads(attn_out).reshape(b * s, d), params["wo"].T, zero_d)
    h_out2 = add_layernorm(a, x2, params["ln_g"], params["ln_b"])       # norm1(a + h)
    h_out = h_out2.reshape(b, s, d)

    # ---- memory update ----
    old_mem = m[:, :seq_len, :]
    lm = old_mem.shape[1]
    lc = lm // cmem_ratio
    # ConvCompress(dim, ratio) == strided matmul over ratio-sized chunks (+ conv bias)
    om = old_mem[:, :lc * cmem_ratio, :].reshape(b * lc, cmem_ratio * d)
    conv_wm = params["conv_w"].transpose(2, 1, 0).reshape(cmem_ratio * d, d)
    new_cm = matmul_bias(om, conv_wm, params["conv_b"]).reshape(b, lc, d)

    new_m = jnp.concatenate([m, x], axis=1)[:, -mem_len:, :]
    new_cmem = jnp.concatenate([cm, new_cm], axis=1)[:, -cmem_len:, :]

    # ---- attention-reconstruction auxiliary loss ----
    # Reference quirk: uses raw (un-transposed) weight matrices via torch.matmul(h, W.data).
    hq = _split_heads(matmul_bias(h_out2, params["wq"], zero_d).reshape(b, s, d), heads)
    wkv_raw = jnp.concatenate([params["wk"], params["wv"]], axis=1)
    kv_old = matmul_bias(old_mem.reshape(b * lm, d), wkv_raw, zero_2d).reshape(b, lm, 2 * d)
    kv_cmp = matmul_bias(new_cm.reshape(b * lc, d), wkv_raw, zero_2d).reshape(b, lc, 2 * d)
    ko, vo = _split_heads(kv_old[..., :d], heads), _split_heads(kv_old[..., d:], heads)
    kc, vc = _split_heads(kv_cmp[..., :d], heads), _split_heads(kv_cmp[..., d:], heads)
    o_old = attention_aux(hq, ko, vo)
    o_cmp = attention_aux(hq, kc, vc)
    l_attn = jnp.mean(jnp.square(o_old - o_cmp))  # TODO(synk): fuse MSE reduction in-kernel.

    return h_out, new_m, new_cmem, l_attn, weights


# --------------------------------------------------------------------------
# deterministic parameter init (torch layouts: Linear (out,in), Conv1d (out,in,k))
# --------------------------------------------------------------------------

def init_params(key, d, cmem_ratio):
    ks = jax.random.split(key, 6)
    lim = 1.0 / math.sqrt(d)

    def lin(kk):
        return jax.random.uniform(kk, (d, d), jnp.float32, -lim, lim)

    clim = 1.0 / math.sqrt(d * cmem_ratio)
    return {
        "wq": lin(ks[0]), "wk": lin(ks[1]), "wv": lin(ks[2]), "wo": lin(ks[3]),
        "conv_w": jax.random.uniform(ks[4], (d, d, cmem_ratio), jnp.float32, -clim, clim),
        "conv_b": jax.random.uniform(ks[5], (d,), jnp.float32, -clim, clim),
        "ln_g": jnp.ones((d,), jnp.float32),
        "ln_b": jnp.zeros((d,), jnp.float32),
    }


# --------------------------------------------------------------------------
# demo
# --------------------------------------------------------------------------

if __name__ == "__main__":
    B, S, D, H = 2, 8, 32, 4
    mem_len, cmem_len, cmem_ratio = 8, 4, 2
    seq_len = S
    Dh = D // H
    Tk = cmem_len + mem_len + S

    key = jax.random.PRNGKey(0)
    kx, km, kc, kp, kparam = jax.random.split(key, 5)

    x = jax.random.normal(kx, (B, S, D), jnp.float32)
    mem = jax.random.normal(km, (B, mem_len, D), jnp.float32)
    cmem = jax.random.normal(kc, (B, cmem_len, D), jnp.float32)
    pos_emb = jax.random.normal(kp, (H, Tk, Dh), jnp.float32) * 0.02
    # padding mask: batch element 1 has its last two tokens padded.
    input_mask = jnp.where(jnp.arange(S)[None, :] < jnp.array([S, S - 2])[:, None],
                           1.0, 0.0).astype(jnp.float32)

    params = init_params(kparam, D, cmem_ratio)

    fwd = jax.jit(functools.partial(
        my_memory_attention, heads=H, seq_len=seq_len, mem_len=mem_len,
        cmem_len=cmem_len, cmem_ratio=cmem_ratio))

    out = fwd(x, (mem, cmem), input_mask, pos_emb, params)
    out = jax.block_until_ready(out)
    h_out, new_m, new_cm, l_attn, weights = out

    assert h_out.shape == (B, S, D)
    assert new_m.shape == (B, mem_len, D)
    assert new_cm.shape == (B, cmem_len, D)
    assert weights.shape == (B, H, S, Tk)
    assert l_attn.shape == ()
    assert bool(jnp.all(jnp.isfinite(h_out)))
    assert bool(jnp.isfinite(l_attn))
    print("KERNEL_OK")
</pallas_src>

<mosaic_0001>
module attributes {stable_mosaic.version = 11 : i64} {
  func.func @_matmul_kernel(%arg0: i32, %arg1: i32, %arg2: i32, %arg3: memref<16x128xf32, #tpu.memory_space<vmem>>, %arg4: memref<128x128xf32, #tpu.memory_space<vmem>>, %arg5: memref<1x128xf32, #tpu.memory_space<vmem>>, %arg6: memref<16x128xf32, #tpu.memory_space<vmem>>, %arg7: memref<16x128xf32, #tpu.memory_space<vmem>>) attributes {dimension_semantics = [#tpu.dimension_semantics<parallel>, #tpu.dimension_semantics<parallel>, #tpu.dimension_semantics<arbitrary>], iteration_bounds = array<i64: 1, 1, 1>, scalar_prefetch = 0 : i64, scratch_operands = 1 : i64, tpu.core_type = #tpu.core_type<tc>, window_params = [{transform_indices = @transform_0, window_bounds = array<i64: 16, 128>}, {transform_indices = @transform_1, window_bounds = array<i64: 128, 128>}, {transform_indices = @transform_2, window_bounds = array<i64: 1, 128>}, {transform_indices = @transform_3, window_bounds = array<i64: 16, 128>}]} {
    %c0_i32 = arith.constant 0 : i32
    %0 = arith.cmpi eq, %arg2, %c0_i32 : i32
    %1 = arith.extui %0 : i1 to i32
    %c0_i32_0 = arith.constant 0 : i32
    %2 = arith.cmpi ne, %1, %c0_i32_0 : i32
    scf.if %2 {
      %cst_10 = arith.constant 0.000000e+00 : f32
      %14 = vector.broadcast %cst_10 : f32 to vector<16x128xf32>
      %c0_11 = arith.constant 0 : index
      %c0_12 = arith.constant 0 : index
      %15 = vector.load %arg7[%c0_11, %c0_12] : memref<16x128xf32, #tpu.memory_space<vmem>>, vector<16x128xf32>
      tpu.vector_store %arg7[%c0_11, %c0_12], %14 {strides = array<i32>} : memref<16x128xf32, #tpu.memory_space<vmem>>, vector<16x128xf32>,
    } else {
    }
    %c0 = arith.constant 0 : index
    %c0_1 = arith.constant 0 : index
    %3 = vector.load %arg7[%c0, %c0_1] : memref<16x128xf32, #tpu.memory_space<vmem>>, vector<16x128xf32>
    %c0_2 = arith.constant 0 : index
    %c0_3 = arith.constant 0 : index
    %4 = vector.load %arg3[%c0_2, %c0_3] : memref<16x128xf32, #tpu.memory_space<vmem>>, vector<16x128xf32>
    %5 = arith.truncf %4 : vector<16x128xf32> to vector<16x128xbf16>
    %c0_4 = arith.constant 0 : index
    %c0_5 = arith.constant 0 : index
    %6 = vector.load %arg4[%c0_4, %c0_5] : memref<128x128xf32, #tpu.memory_space<vmem>>, vector<128x128xf32>
    %7 = arith.truncf %6 : vector<128x128xf32> to vector<128x128xbf16>
    %cst = arith.constant dense<0.000000e+00> : vector<16x128xf32>
    %8 = tpu.matmul %5, %7, %cst {dimension_numbers = #tpu.dot_dimension_numbers<[1], [0], [0], [1], [0, 0, 1, 1], [], []>} : vector<16x128xbf16>, vector<128x128xbf16>, vector<16x128xf32> -> vector<16x128xf32>
    %9 = arith.addf %3, %8 : vector<16x128xf32>
    %c0_6 = arith.constant 0 : index
    %c0_7 = arith.constant 0 : index
    %10 = vector.load %arg7[%c0_6, %c0_7] : memref<16x128xf32, #tpu.memory_space<vmem>>, vector<16x128xf32>
    tpu.vector_store %arg7[%c0_6, %c0_7], %9 {strides = array<i32>} : memref<16x128xf32, #tpu.memory_space<vmem>>, vector<16x128xf32>,
    %c0_i32_8 = arith.constant 0 : i32
    %11 = arith.cmpi eq, %arg2, %c0_i32_8 : i32
    %12 = arith.extui %11 : i1 to i32
    %c0_i32_9 = arith.constant 0 : i32
    %13 = arith.cmpi ne, %12, %c0_i32_9 : i32
    scf.if %13 {
      %c0_10 = arith.constant 0 : index
      %c0_11 = arith.constant 0 : index
      %14 = vector.load %arg7[%c0_10, %c0_11] : memref<16x128xf32, #tpu.memory_space<vmem>>, vector<16x128xf32>
      %c0_12 = arith.constant 0 : index
      %c0_13 = arith.constant 0 : index
      %15 = vector.load %arg5[%c0_12, %c0_13] : memref<1x128xf32, #tpu.memory_space<vmem>>, vector<1x128xf32>
      %16 = vector.broadcast %15 : vector<1x128xf32> to vector<16x128xf32>
      %17 = arith.addf %14, %16 : vector<16x128xf32>
      %c0_14 = arith.constant 0 : index
      %c0_15 = arith.constant 0 : index
      %18 = vector.load %arg6[%c0_14, %c0_15] : memref<16x128xf32, #tpu.memory_space<vmem>>, vector<16x128xf32>
      tpu.vector_store %arg6[%c0_14, %c0_15], %17 {strides = array<i32>} : memref<16x128xf32, #tpu.memory_space<vmem>>, vector<16x128xf32>,
    } else {
    }
    return
  }
  func.func @transform_0(%arg0: i32, %arg1: i32, %arg2: i32) -> (i32, i32) {
    %c0_i32 = arith.constant 0 : i32
    return %arg0, %arg2 : i32, i32
  }
  func.func @transform_1(%arg0: i32, %arg1: i32, %arg2: i32) -> (i32, i32) {
    %c0_i32 = arith.constant 0 : i32
    return %arg2, %arg1 : i32, i32
  }
  func.func @transform_2(%arg0: i32, %arg1: i32, %arg2: i32) -> (i32, i32) {
    %c0_i32 = arith.constant 0 : i32
    %c0_i32_0 = arith.constant 0 : i32
    return %c0_i32, %arg1 : i32, i32
  }
  func.func @transform_3(%arg0: i32, %arg1: i32, %arg2: i32) -> (i32, i32) {
    %c0_i32 = arith.constant 0 : i32
    return %arg0, %arg1 : i32, i32
  }
}

module attributes {stable_mosaic.version = 11 : i64} {
  func.func @_matmul_kernel(%arg0: i32, %arg1: i32, %arg2: i32, %arg3: memref<40x128xf32, #tpu.memory_space<vmem>>, %arg4: memref<128x128xf32, #tpu.memory_space<vmem>>, %arg5: memref<1x128xf32, #tpu.memory_space<vmem>>, %arg6: memref<40x128xf32, #tpu.memory_space<vmem>>, %arg7: memref<40x128xf32, #tpu.memory_space<vmem>>) attributes {dimension_semantics = [#tpu.dimension_semantics<parallel>, #tpu.dimension_semantics<parallel>, #tpu.dimension_semantics<arbitrary>], iteration_bounds = array<i64: 1, 1, 1>, scalar_prefetch = 0 : i64, scratch_operands = 1 : i64, tpu.core_type = #tpu.core_type<tc>, window_params = [{transform_indices = @transform_0, window_bounds = array<i64: 40, 128>}, {transform_indices = @transform_1, window_bounds = array<i64: 128, 128>}, {transform_indices = @transform_2, window_bounds = array<i64: 1, 128>}, {transform_indices = @transform_3, window_bounds = array<i64: 40, 128>}]} {
    %c0_i32 = arith.constant 0 : i32
    %0 = arith.cmpi eq, %arg2, %c0_i32 : i32
    %1 = arith.extui %0 : i1 to i32
    %c0_i32_0 = arith.constant 0 : i32
    %2 = arith.cmpi ne, %1, %c0_i32_0 : i32
    scf.if %2 {
      %cst_10 = arith.constant 0.000000e+00 : f32
      %14 = vector.broadcast %cst_10 : f32 to vector<40x128xf32>
      %c0_11 = arith.constant 0 : index
      %c0_12 = arith.constant 0 : index
      %15 = vector.load %arg7[%c0_11, %c0_12] : memref<40x128xf32, #tpu.memory_space<vmem>>, vector<40x128xf32>
      tpu.vector_store %arg7[%c0_11, %c0_12], %14 {strides = array<i32>} : memref<40x128xf32, #tpu.memory_space<vmem>>, vector<40x128xf32>,
    } else {
    }
    %c0 = arith.constant 0 : index
    %c0_1 = arith.constant 0 : index
    %3 = vector.load %arg7[%c0, %c0_1] : memref<40x128xf32, #tpu.memory_space<vmem>>, vector<40x128xf32>
    %c0_2 = arith.constant 0 : index
    %c0_3 = arith.constant 0 : index
    %4 = vector.load %arg3[%c0_2, %c0_3] : memref<40x128xf32, #tpu.memory_space<vmem>>, vector<40x128xf32>
    %5 = arith.truncf %4 : vector<40x128xf32> to vector<40x128xbf16>
    %c0_4 = arith.constant 0 : index
    %c0_5 = arith.constant 0 : index
    %6 = vector.load %arg4[%c0_4, %c0_5] : memref<128x128xf32, #tpu.memory_space<vmem>>, vector<128x128xf32>
    %7 = arith.truncf %6 : vector<128x128xf32> to vector<128x128xbf16>
    %cst = arith.constant dense<0.000000e+00> : vector<40x128xf32>
    %8 = tpu.matmul %5, %7, %cst {dimension_numbers = #tpu.dot_dimension_numbers<[1], [0], [0], [1], [0, 0, 1, 1], [], []>} : vector<40x128xbf16>, vector<128x128xbf16>, vector<40x128xf32> -> vector<40x128xf32>
    %9 = arith.addf %3, %8 : vector<40x128xf32>
    %c0_6 = arith.constant 0 : index
    %c0_7 = arith.constant 0 : index
    %10 = vector.load %arg7[%c0_6, %c0_7] : memref<40x128xf32, #tpu.memory_space<vmem>>, vector<40x128xf32>
    tpu.vector_store %arg7[%c0_6, %c0_7], %9 {strides = array<i32>} : memref<40x128xf32, #tpu.memory_space<vmem>>, vector<40x128xf32>,
    %c0_i32_8 = arith.constant 0 : i32
    %11 = arith.cmpi eq, %arg2, %c0_i32_8 : i32
    %12 = arith.extui %11 : i1 to i32
    %c0_i32_9 = arith.constant 0 : i32
    %13 = arith.cmpi ne, %12, %c0_i32_9 : i32
    scf.if %13 {
      %c0_10 = arith.constant 0 : index
      %c0_11 = arith.constant 0 : index
      %14 = vector.load %arg7[%c0_10, %c0_11] : memref<40x128xf32, #tpu.memory_space<vmem>>, vector<40x128xf32>
      %c0_12 = arith.constant 0 : index
      %c0_13 = arith.constant 0 : index
      %15 = vector.load %arg5[%c0_12, %c0_13] : memref<1x128xf32, #tpu.memory_space<vmem>>, vector<1x128xf32>
      %16 = vector.broadcast %15 : vector<1x128xf32> to vector<40x128xf32>
      %17 = arith.addf %14, %16 : vector<40x128xf32>
      %c0_14 = arith.constant 0 : index
      %c0_15 = arith.constant 0 : index
      %18 = vector.load %arg6[%c0_14, %c0_15] : memref<40x128xf32, #tpu.memory_space<vmem>>, vector<40x128xf32>
      tpu.vector_store %arg6[%c0_14, %c0_15], %17 {strides = array<i32>} : memref<40x128xf32, #tpu.memory_space<vmem>>, vector<40x128xf32>,
    } else {
    }
    return
  }
  func.func @transform_0(%arg0: i32, %arg1: i32, %arg2: i32) -> (i32, i32) {
    %c0_i32 = arith.constant 0 : i32
    return %arg0, %arg2 : i32, i32
  }
  func.func @transform_1(%arg0: i32, %arg1: i32, %arg2: i32) -> (i32, i32) {
    %c0_i32 = arith.constant 0 : i32
    return %arg2, %arg1 : i32, i32
  }
  func.func @transform_2(%arg0: i32, %arg1: i32, %arg2: i32) -> (i32, i32) {
    %c0_i32 = arith.constant 0 : i32
    %c0_i32_0 = arith.constant 0 : i32
    return %c0_i32, %arg1 : i32, i32
  }
  func.func @transform_3(%arg0: i32, %arg1: i32, %arg2: i32) -> (i32, i32) {
    %c0_i32 = arith.constant 0 : i32
    return %arg0, %arg1 : i32, i32
  }
}

module attributes {stable_mosaic.version = 11 : i64} {
  func.func @_attn_main_kernel(%arg0: i32, %arg1: i32, %arg2: memref<1x1x8x8xf32, #tpu.memory_space<vmem>>, %arg3: memref<1x1x20x8xf32, #tpu.memory_space<vmem>>, %arg4: memref<1x1x20x8xf32, #tpu.memory_space<vmem>>, %arg5: memref<1x8x1xf32, #tpu.memory_space<vmem>>, %arg6: memref<1x1x20xf32, #tpu.memory_space<vmem>>, %arg7: memref<1x1x8x20xf32, #tpu.memory_space<vmem>>, %arg8: memref<1x1x8x8xf32, #tpu.memory_space<vmem>>, %arg9: memref<1x1x8x20xf32, #tpu.memory_space<vmem>>) attributes {dimension_semantics = [#tpu.dimension_semantics<parallel>, #tpu.dimension_semantics<parallel>], iteration_bounds = array<i64: 2, 4>, scalar_prefetch = 0 : i64, scratch_operands = 0 : i64, tpu.core_type = #tpu.core_type<tc>, window_params = [{transform_indices = @transform_0, window_bounds = array<i64: 1, 1, 8, 8>}, {transform_indices = @transform_1, window_bounds = array<i64: 1, 1, 20, 8>}, {transform_indices = @transform_2, window_bounds = array<i64: 1, 1, 20, 8>}, {transform_indices = @transform_3, window_bounds = array<i64: 1, 8, 1>}, {transform_indices = @transform_4, window_bounds = array<i64: 1, 1, 20>}, {transform_indices = @transform_5, window_bounds = array<i64: 1, 1, 8, 20>}, {transform_indices = @transform_6, window_bounds = array<i64: 1, 1, 8, 8>}, {transform_indices = @transform_7, window_bounds = array<i64: 1, 1, 8, 20>}]} {
    %c0 = arith.constant 0 : index
    %c0_0 = arith.constant 0 : index
    %c0_1 = arith.constant 0 : index
    %c0_2 = arith.constant 0 : index
    %0 = vector.load %arg2[%c0, %c0_0, %c0_1, %c0_2] : memref<1x1x8x8xf32, #tpu.memory_space<vmem>>, vector<1x1x8x8xf32>
    %1 = vector.shape_cast %0 : vector<1x1x8x8xf32> to vector<8x8xf32>
    %2 = arith.truncf %1 : vector<8x8xf32> to vector<8x8xbf16>
    %c0_3 = arith.constant 0 : index
    %c0_4 = arith.constant 0 : index
    %c0_5 = arith.constant 0 : index
    %c0_6 = arith.constant 0 : index
    %3 = vector.load %arg3[%c0_3, %c0_4, %c0_5, %c0_6] : memref<1x1x20x8xf32, #tpu.memory_space<vmem>>, vector<1x1x20x8xf32>
    %4 = vector.shape_cast %3 : vector<1x1x20x8xf32> to vector<20x8xf32>
    %5 = arith.truncf %4 : vector<20x8xf32> to vector<20x8xbf16>
    %cst = arith.constant dense<0.000000e+00> : vector<8x20xf32>
    %6 = tpu.matmul %2, %5, %cst {dimension_numbers = #tpu.dot_dimension_numbers<[1], [1], [0], [0], [0, 0, 1, 0], [], []>} : vector<8x8xbf16>, vector<20x8xbf16>, vector<8x20xf32> -> vector<8x20xf32>
    %cst_7 = arith.constant 0.353553385 : f32
    %7 = vector.broadcast %cst_7 : f32 to vector<8x20xf32>
    %8 = arith.mulf %6, %7 : vector<8x20xf32>
    %c0_8 = arith.constant 0 : index
    %c0_9 = arith.constant 0 : index
    %c0_10 = arith.constant 0 : index
    %c0_11 = arith.constant 0 : index
    %9 = vector.load %arg7[%c0_8, %c0_9, %c0_10, %c0_11] : memref<1x1x8x20xf32, #tpu.memory_space<vmem>>, vector<1x1x8x20xf32>
    %10 = vector.shape_cast %9 : vector<1x1x8x20xf32> to vector<8x20xf32>
    %11 = arith.addf %8, %10 : vector<8x20xf32>
    %12 = tpu.iota {dimensions = array<i32: 1>} : vector<8x20xi32>
    %c0_12 = arith.constant 0 : index
    %c0_13 = arith.constant 0 : index
    %c0_14 = arith.constant 0 : index
    %13 = vector.load %arg5[%c0_12, %c0_13, %c0_14] : memref<1x8x1xf32, #tpu.memory_space<vmem>>, vector<1x8x1xf32>
    %14 = vector.shape_cast %13 : vector<1x8x1xf32> to vector<8x1xf32>
    %c0_15 = arith.constant 0 : index
    %c0_16 = arith.constant 0 : index
    %c0_17 = arith.constant 0 : index
    %15 = vector.load %arg6[%c0_15, %c0_16, %c0_17] : memref<1x1x20xf32, #tpu.memory_space<vmem>>, vector<1x1x20xf32>
    %16 = vector.shape_cast %15 : vector<1x1x20xf32> to vector<1x20xf32>
    %c12_i32 = arith.constant 12 : i32
    %17 = vector.broadcast %c12_i32 : i32 to vector<8x20xi32>
    %18 = arith.cmpi slt, %12, %17 : vector<8x20xi32>
    %cst_18 = arith.constant 1.000000e+00 : f32
    %19 = vector.broadcast %cst_18 : f32 to vector<8x20xf32>
    %20 = vector.shape_cast %14 : vector<8x1xf32> to vector<8x1xf32>
    %21 = vector.broadcast %20 : vector<8x1xf32> to vector<8x20xf32>
    %22 = arith.select %18, %19, %21 : vector<8x20xi1>, vector<8x20xf32>
    %23 = vector.broadcast %16 : vector<1x20xf32> to vector<8x20xf32>
    %24 = arith.mulf %22, %23 : vector<8x20xf32>
    %cst_19 = arith.constant 0.000000e+00 : f32
    %25 = vector.broadcast %cst_19 : f32 to vector<8x20xf32>
    %26 = arith.cmpf ogt, %24, %25 : vector<8x20xf32>
    %cst_20 = arith.constant -1.000000e+09 : f32
    %27 = vector.broadcast %cst_20 : f32 to vector<8x20xf32>
    %28 = arith.select %26, %11, %27 : vector<8x20xi1>, vector<8x20xf32>
    %cst_21 = arith.constant dense<0xFF800000> : vector<8xf32>
    %29 = vector.multi_reduction <maximumf>, %28, %cst_21 [1] : vector<8x20xf32> to vector<8xf32>
    %30 = vector.shape_cast %29 : vector<8xf32> to vector<8x1xf32>
    %31 = vector.broadcast %30 : vector<8x1xf32> to vector<8x20xf32>
    %32 = arith.subf %28, %31 : vector<8x20xf32>
    %33 = math.exp %32 : vector<8x20xf32>
    %cst_22 = arith.constant dense<0.000000e+00> : vector<8xf32>
    %34 = vector.multi_reduction <add>, %33, %cst_22 [1] : vector<8x20xf32> to vector<8xf32>
    %35 = vector.shape_cast %34 : vector<8xf32> to vector<8x1xf32>
    %36 = tpu.reciprocal %35 {approx = true} : vector<8x1xf32> -> vector<8x1xf32>
    %37 = vector.broadcast %36 : vector<8x1xf32> to vector<8x20xf32>
    %38 = arith.mulf %33, %37 : vector<8x20xf32>
    %39 = arith.truncf %38 : vector<8x20xf32> to vector<8x20xbf16>
    %c0_23 = arith.constant 0 : index
    %c0_24 = arith.constant 0 : index
    %c0_25 = arith.constant 0 : index
    %c0_26 = arith.constant 0 : index
    %40 = vector.load %arg4[%c0_23, %c0_24, %c0_25, %c0_26] : memref<1x1x20x8xf32, #tpu.memory_space<vmem>>, vector<1x1x20x8xf32>
    %41 = vector.shape_cast %40 : vector<1x1x20x8xf32> to vector<20x8xf32>
    %42 = arith.truncf %41 : vector<20x8xf32> to vector<20x8xbf16>
    %cst_27 = arith.constant dense<0.000000e+00> : vector<8x8xf32>
    %43 = tpu.matmul %39, %42, %cst_27 {dimension_numbers = #tpu.dot_dimension_numbers<[1], [0], [0], [1], [0, 0, 1, 1], [], []>} : vector<8x20xbf16>, vector<20x8xbf16>, vector<8x8xf32> -> vector<8x8xf32>
    %c0_28 = arith.constant 0 : index
    %c0_29 = arith.constant 0 : index
    %c0_30 = arith.constant 0 : index
    %c0_31 = arith.constant 0 : index
    %44 = vector.load %arg8[%c0_28, %c0_29, %c0_30, %c0_31] : memref<1x1x8x8xf32, #tpu.memory_space<vmem>>, vector<1x1x8x8xf32>
    %45 = vector.shape_cast %44 : vector<1x1x8x8xf32> to vector<8x8xf32>
    %46 = vector.shape_cast %43 : vector<8x8xf32> to vector<1x1x8x8xf32>
    tpu.vector_store %arg8[%c0_28, %c0_29, %c0_30, %c0_31], %46 {strides = array<i32>} : memref<1x1x8x8xf32, #tpu.memory_space<vmem>>, vector<1x1x8x8xf32>,
    %c0_32 = arith.constant 0 : index
    %c0_33 = arith.constant 0 : index
    %c0_34 = arith.constant 0 : index
    %c0_35 = arith.constant 0 : index
    %47 = vector.load %arg9[%c0_32, %c0_33, %c0_34, %c0_35] : memref<1x1x8x20xf32, #tpu.memory_space<vmem>>, vector<1x1x8x20xf32>
    %48 = vector.shape_cast %47 : vector<1x1x8x20xf32> to vector<8x20xf32>
    %49 = vector.shape_cast %38 : vector<8x20xf32> to vector<1x1x8x20xf32>
    tpu.vector_store %arg9[%c0_32, %c0_33, %c0_34, %c0_35], %49 {strides = array<i32>} : memref<1x1x8x20xf32, #tpu.memory_space<vmem>>, vector<1x1x8x20xf32>,
    return
  }
  func.func @transform_0(%arg0: i32, %arg1: i32) -> (i32, i32, i32, i32) {
    %c0_i32 = arith.constant 0 : i32
    %c0_i32_0 = arith.constant 0 : i32
    %c0_i32_1 = arith.constant 0 : i32
    return %arg0, %arg1, %c0_i32, %c0_i32_0 : i32, i32, i32, i32
  }
  func.func @transform_1(%arg0: i32, %arg1: i32) -> (i32, i32, i32, i32) {
    %c0_i32 = arith.constant 0 : i32
    %c0_i32_0 = arith.constant 0 : i32
    %c0_i32_1 = arith.constant 0 : i32
    return %arg0, %arg1, %c0_i32, %c0_i32_0 : i32, i32, i32, i32
  }
  func.func @transform_2(%arg0: i32, %arg1: i32) -> (i32, i32, i32, i32) {
    %c0_i32 = arith.constant 0 : i32
    %c0_i32_0 = arith.constant 0 : i32
    %c0_i32_1 = arith.constant 0 : i32
    return %arg0, %arg1, %c0_i32, %c0_i32_0 : i32, i32, i32, i32
  }
  func.func @transform_3(%arg0: i32, %arg1: i32) -> (i32, i32, i32) {
    %c0_i32 = arith.constant 0 : i32
    %c0_i32_0 = arith.constant 0 : i32
    %c0_i32_1 = arith.constant 0 : i32
    return %arg0, %c0_i32, %c0_i32_0 : i32, i32, i32
  }
  func.func @transform_4(%arg0: i32, %arg1: i32) -> (i32, i32, i32) {
    %c0_i32 = arith.constant 0 : i32
    %c0_i32_0 = arith.constant 0 : i32
    %c0_i32_1 = arith.constant 0 : i32
    return %arg0, %c0_i32, %c0_i32_0 : i32, i32, i32
  }
  func.func @transform_5(%arg0: i32, %arg1: i32) -> (i32, i32, i32, i32) {
    %c0_i32 = arith.constant 0 : i32
    %c0_i32_0 = arith.constant 0 : i32
    %c0_i32_1 = arith.constant 0 : i32
    return %arg0, %arg1, %c0_i32, %c0_i32_0 : i32, i32, i32, i32
  }
  func.func @transform_6(%arg0: i32, %arg1: i32) -> (i32, i32, i32, i32) {
    %c0_i32 = arith.constant 0 : i32
    %c0_i32_0 = arith.constant 0 : i32
    %c0_i32_1 = arith.constant 0 : i32
    return %arg0, %arg1, %c0_i32, %c0_i32_0 : i32, i32, i32, i32
  }
  func.func @transform_7(%arg0: i32, %arg1: i32) -> (i32, i32, i32, i32) {
    %c0_i32 = arith.constant 0 : i32
    %c0_i32_0 = arith.constant 0 : i32
    %c0_i32_1 = arith.constant 0 : i32
    return %arg0, %arg1, %c0_i32, %c0_i32_0 : i32, i32, i32, i32
  }
}

module attributes {stable_mosaic.version = 11 : i64} {
  func.func @_add_layernorm_kernel(%arg0: i32, %arg1: memref<16x32xf32, #tpu.memory_space<vmem>>, %arg2: memref<16x32xf32, #tpu.memory_space<vmem>>, %arg3: memref<1x32xf32, #tpu.memory_space<vmem>>, %arg4: memref<1x32xf32, #tpu.memory_space<vmem>>, %arg5: memref<16x32xf32, #tpu.memory_space<vmem>>) attributes {dimension_semantics = [#tpu.dimension_semantics<parallel>], iteration_bounds = array<i64: 1>, scalar_prefetch = 0 : i64, scratch_operands = 0 : i64, tpu.core_type = #tpu.core_type<tc>, window_params = [{transform_indices = @transform_0, window_bounds = array<i64: 16, 32>}, {transform_indices = @transform_1, window_bounds = array<i64: 16, 32>}, {pipeline_mode = #tpu.pipeline_mode<synchronous>, transform_indices = @transform_2, window_bounds = array<i64: 1, 32>}, {pipeline_mode = #tpu.pipeline_mode<synchronous>, transform_indices = @transform_3, window_bounds = array<i64: 1, 32>}, {transform_indices = @transform_4, window_bounds = array<i64: 16, 32>}]} {
    %c0 = arith.constant 0 : index
    %c0_0 = arith.constant 0 : index
    %0 = vector.load %arg1[%c0, %c0_0] : memref<16x32xf32, #tpu.memory_space<vmem>>, vector<16x32xf32>
    %c0_1 = arith.constant 0 : index
    %c0_2 = arith.constant 0 : index
    %1 = vector.load %arg2[%c0_1, %c0_2] : memref<16x32xf32, #tpu.memory_space<vmem>>, vector<16x32xf32>
    %2 = arith.addf %0, %1 : vector<16x32xf32>
    %cst = arith.constant dense<0.000000e+00> : vector<16xf32>
    %3 = vector.multi_reduction <add>, %2, %cst [1] : vector<16x32xf32> to vector<16xf32>
    %4 = vector.shape_cast %3 : vector<16xf32> to vector<16x1xf32>
    %cst_3 = arith.constant 3.200000e+01 : f32
    %5 = vector.broadcast %cst_3 : f32 to vector<16x1xf32>
    %6 = arith.divf %4, %5 : vector<16x1xf32>
    %7 = vector.broadcast %6 : vector<16x1xf32> to vector<16x32xf32>
    %8 = arith.subf %2, %7 : vector<16x32xf32>
    %9 = arith.mulf %8, %8 : vector<16x32xf32>
    %cst_4 = arith.constant dense<0.000000e+00> : vector<16xf32>
    %10 = vector.multi_reduction <add>, %9, %cst_4 [1] : vector<16x32xf32> to vector<16xf32>
    %11 = vector.shape_cast %10 : vector<16xf32> to vector<16x1xf32>
    %cst_5 = arith.constant 3.200000e+01 : f32
    %12 = vector.broadcast %cst_5 : f32 to vector<16x1xf32>
    %13 = arith.divf %11, %12 : vector<16x1xf32>
    %14 = vector.broadcast %6 : vector<16x1xf32> to vector<16x32xf32>
    %15 = arith.subf %2, %14 : vector<16x32xf32>
    %cst_6 = arith.constant 9.99999974E-6 : f32
    %16 = vector.broadcast %cst_6 : f32 to vector<16x1xf32>
    %17 = arith.addf %13, %16 : vector<16x1xf32>
    %18 = math.rsqrt %17 : vector<16x1xf32>
    %19 = vector.broadcast %18 : vector<16x1xf32> to vector<16x32xf32>
    %20 = arith.mulf %15, %19 : vector<16x32xf32>
    %c0_7 = arith.constant 0 : index
    %c0_8 = arith.constant 0 : index
    %21 = vector.load %arg3[%c0_7, %c0_8] : memref<1x32xf32, #tpu.memory_space<vmem>>, vector<1x32xf32>
    %22 = vector.broadcast %21 : vector<1x32xf32> to vector<16x32xf32>
    %23 = arith.mulf %20, %22 : vector<16x32xf32>
    %c0_9 = arith.constant 0 : index
    %c0_10 = arith.constant 0 : index
    %24 = vector.load %arg4[%c0_9, %c0_10] : memref<1x32xf32, #tpu.memory_space<vmem>>, vector<1x32xf32>
    %25 = vector.broadcast %24 : vector<1x32xf32> to vector<16x32xf32>
    %26 = arith.addf %23, %25 : vector<16x32xf32>
    %c0_11 = arith.constant 0 : index
    %c0_12 = arith.constant 0 : index
    %27 = vector.load %arg5[%c0_11, %c0_12] : memref<16x32xf32, #tpu.memory_space<vmem>>, vector<16x32xf32>
    tpu.vector_store %arg5[%c0_11, %c0_12], %26 {strides = array<i32>} : memref<16x32xf32, #tpu.memory_space<vmem>>, vector<16x32xf32>,
    return
  }
  func.func @transform_0(%arg0: i32) -> (i32, i32) {
    %c0_i32 = arith.constant 0 : i32
    %c0_i32_0 = arith.constant 0 : i32
    return %arg0, %c0_i32 : i32, i32
  }
  func.func @transform_1(%arg0: i32) -> (i32, i32) {
    %c0_i32 = arith.constant 0 : i32
    %c0_i32_0 = arith.constant 0 : i32
    return %arg0, %c0_i32 : i32, i32
  }
  func.func @transform_2(%arg0: i32) -> (i32, i32) {
    %c0_i32 = arith.constant 0 : i32
    %c0_i32_0 = arith.constant 0 : i32
    %c0_i32_1 = arith.constant 0 : i32
    return %c0_i32, %c0_i32_0 : i32, i32
  }
  func.func @transform_3(%arg0: i32) -> (i32, i32) {
    %c0_i32 = arith.constant 0 : i32
    %c0_i32_0 = arith.constant 0 : i32
    %c0_i32_1 = arith.constant 0 : i32
    return %c0_i32, %c0_i32_0 : i32, i32
  }
  func.func @transform_4(%arg0: i32) -> (i32, i32) {
    %c0_i32 = arith.constant 0 : i32
    %c0_i32_0 = arith.constant 0 : i32
    return %arg0, %c0_i32 : i32, i32
  }
}

module attributes {stable_mosaic.version = 11 : i64} {
  func.func @_matmul_kernel(%arg0: i32, %arg1: i32, %arg2: i32, %arg3: memref<8x128xf32, #tpu.memory_space<vmem>>, %arg4: memref<128x128xf32, #tpu.memory_space<vmem>>, %arg5: memref<1x128xf32, #tpu.memory_space<vmem>>, %arg6: memref<8x128xf32, #tpu.memory_space<vmem>>, %arg7: memref<8x128xf32, #tpu.memory_space<vmem>>) attributes {dimension_semantics = [#tpu.dimension_semantics<parallel>, #tpu.dimension_semantics<parallel>, #tpu.dimension_semantics<arbitrary>], iteration_bounds = array<i64: 1, 1, 1>, scalar_prefetch = 0 : i64, scratch_operands = 1 : i64, tpu.core_type = #tpu.core_type<tc>, window_params = [{transform_indices = @transform_0, window_bounds = array<i64: 8, 128>}, {transform_indices = @transform_1, window_bounds = array<i64: 128, 128>}, {transform_indices = @transform_2, window_bounds = array<i64: 1, 128>}, {transform_indices = @transform_3, window_bounds = array<i64: 8, 128>}]} {
    %c0_i32 = arith.constant 0 : i32
    %0 = arith.cmpi eq, %arg2, %c0_i32 : i32
    %1 = arith.extui %0 : i1 to i32
    %c0_i32_0 = arith.constant 0 : i32
    %2 = arith.cmpi ne, %1, %c0_i32_0 : i32
    scf.if %2 {
      %cst_10 = arith.constant 0.000000e+00 : f32
      %14 = vector.broadcast %cst_10 : f32 to vector<8x128xf32>
      %c0_11 = arith.constant 0 : index
      %c0_12 = arith.constant 0 : index
      %15 = vector.load %arg7[%c0_11, %c0_12] : memref<8x128xf32, #tpu.memory_space<vmem>>, vector<8x128xf32>
      tpu.vector_store %arg7[%c0_11, %c0_12], %14 {strides = array<i32>} : memref<8x128xf32, #tpu.memory_space<vmem>>, vector<8x128xf32>,
    } else {
    }
    %c0 = arith.constant 0 : index
    %c0_1 = arith.constant 0 : index
    %3 = vector.load %arg7[%c0, %c0_1] : memref<8x128xf32, #tpu.memory_space<vmem>>, vector<8x128xf32>
    %c0_2 = arith.constant 0 : index
    %c0_3 = arith.constant 0 : index
    %4 = vector.load %arg3[%c0_2, %c0_3] : memref<8x128xf32, #tpu.memory_space<vmem>>, vector<8x128xf32>
    %5 = arith.truncf %4 : vector<8x128xf32> to vector<8x128xbf16>
    %c0_4 = arith.constant 0 : index
    %c0_5 = arith.constant 0 : index
    %6 = vector.load %arg4[%c0_4, %c0_5] : memref<128x128xf32, #tpu.memory_space<vmem>>, vector<128x128xf32>
    %7 = arith.truncf %6 : vector<128x128xf32> to vector<128x128xbf16>
    %cst = arith.constant dense<0.000000e+00> : vector<8x128xf32>
    %8 = tpu.matmul %5, %7, %cst {dimension_numbers = #tpu.dot_dimension_numbers<[1], [0], [0], [1], [0, 0, 1, 1], [], []>} : vector<8x128xbf16>, vector<128x128xbf16>, vector<8x128xf32> -> vector<8x128xf32>
    %9 = arith.addf %3, %8 : vector<8x128xf32>
    %c0_6 = arith.constant 0 : index
    %c0_7 = arith.constant 0 : index
    %10 = vector.load %arg7[%c0_6, %c0_7] : memref<8x128xf32, #tpu.memory_space<vmem>>, vector<8x128xf32>
    tpu.vector_store %arg7[%c0_6, %c0_7], %9 {strides = array<i32>} : memref<8x128xf32, #tpu.memory_space<vmem>>, vector<8x128xf32>,
    %c0_i32_8 = arith.constant 0 : i32
    %11 = arith.cmpi eq, %arg2, %c0_i32_8 : i32
    %12 = arith.extui %11 : i1 to i32
    %c0_i32_9 = arith.constant 0 : i32
    %13 = arith.cmpi ne, %12, %c0_i32_9 : i32
    scf.if %13 {
      %c0_10 = arith.constant 0 : index
      %c0_11 = arith.constant 0 : index
      %14 = vector.load %arg7[%c0_10, %c0_11] : memref<8x128xf32, #tpu.memory_space<vmem>>, vector<8x128xf32>
      %c0_12 = arith.constant 0 : index
      %c0_13 = arith.constant 0 : index
      %15 = vector.load %arg5[%c0_12, %c0_13] : memref<1x128xf32, #tpu.memory_space<vmem>>, vector<1x128xf32>
      %16 = vector.broadcast %15 : vector<1x128xf32> to vector<8x128xf32>
      %17 = arith.addf %14, %16 : vector<8x128xf32>
      %c0_14 = arith.constant 0 : index
      %c0_15 = arith.constant 0 : index
      %18 = vector.load %arg6[%c0_14, %c0_15] : memref<8x128xf32, #tpu.memory_space<vmem>>, vector<8x128xf32>
      tpu.vector_store %arg6[%c0_14, %c0_15], %17 {strides = array<i32>} : memref<8x128xf32, #tpu.memory_space<vmem>>, vector<8x128xf32>,
    } else {
    }
    return
  }
  func.func @transform_0(%arg0: i32, %arg1: i32, %arg2: i32) -> (i32, i32) {
    %c0_i32 = arith.constant 0 : i32
    return %arg0, %arg2 : i32, i32
  }
  func.func @transform_1(%arg0: i32, %arg1: i32, %arg2: i32) -> (i32, i32) {
    %c0_i32 = arith.constant 0 : i32
    return %arg2, %arg1 : i32, i32
  }
  func.func @transform_2(%arg0: i32, %arg1: i32, %arg2: i32) -> (i32, i32) {
    %c0_i32 = arith.constant 0 : i32
    %c0_i32_0 = arith.constant 0 : i32
    return %c0_i32, %arg1 : i32, i32
  }
  func.func @transform_3(%arg0: i32, %arg1: i32, %arg2: i32) -> (i32, i32) {
    %c0_i32 = arith.constant 0 : i32
    return %arg0, %arg1 : i32, i32
  }
}

module attributes {stable_mosaic.version = 11 : i64} {
  func.func @_attn_aux_kernel(%arg0: i32, %arg1: i32, %arg2: memref<1x1x8x8xf32, #tpu.memory_space<vmem>>, %arg3: memref<1x1x4x8xf32, #tpu.memory_space<vmem>>, %arg4: memref<1x1x4x8xf32, #tpu.memory_space<vmem>>, %arg5: memref<1x1x8x8xf32, #tpu.memory_space<vmem>>) attributes {dimension_semantics = [#tpu.dimension_semantics<parallel>, #tpu.dimension_semantics<parallel>], iteration_bounds = array<i64: 2, 4>, scalar_prefetch = 0 : i64, scratch_operands = 0 : i64, tpu.core_type = #tpu.core_type<tc>, window_params = [{transform_indices = @transform_0, window_bounds = array<i64: 1, 1, 8, 8>}, {transform_indices = @transform_1, window_bounds = array<i64: 1, 1, 4, 8>}, {transform_indices = @transform_2, window_bounds = array<i64: 1, 1, 4, 8>}, {transform_indices = @transform_3, window_bounds = array<i64: 1, 1, 8, 8>}]} {
    %c0 = arith.constant 0 : index
    %c0_0 = arith.constant 0 : index
    %c0_1 = arith.constant 0 : index
    %c0_2 = arith.constant 0 : index
    %0 = vector.load %arg2[%c0, %c0_0, %c0_1, %c0_2] : memref<1x1x8x8xf32, #tpu.memory_space<vmem>>, vector<1x1x8x8xf32>
    %1 = vector.shape_cast %0 : vector<1x1x8x8xf32> to vector<8x8xf32>
    %2 = arith.truncf %1 : vector<8x8xf32> to vector<8x8xbf16>
    %c0_3 = arith.constant 0 : index
    %c0_4 = arith.constant 0 : index
    %c0_5 = arith.constant 0 : index
    %c0_6 = arith.constant 0 : index
    %3 = vector.load %arg3[%c0_3, %c0_4, %c0_5, %c0_6] : memref<1x1x4x8xf32, #tpu.memory_space<vmem>>, vector<1x1x4x8xf32>
    %4 = vector.shape_cast %3 : vector<1x1x4x8xf32> to vector<4x8xf32>
    %5 = arith.truncf %4 : vector<4x8xf32> to vector<4x8xbf16>
    %cst = arith.constant dense<0.000000e+00> : vector<8x4xf32>
    %6 = tpu.matmul %2, %5, %cst {dimension_numbers = #tpu.dot_dimension_numbers<[1], [1], [0], [0], [0, 0, 1, 0], [], []>} : vector<8x8xbf16>, vector<4x8xbf16>, vector<8x4xf32> -> vector<8x4xf32>
    %cst_7 = arith.constant 0.353553385 : f32
    %7 = vector.broadcast %cst_7 : f32 to vector<8x4xf32>
    %8 = arith.mulf %6, %7 : vector<8x4xf32>
    %cst_8 = arith.constant dense<0xFF800000> : vector<8xf32>
    %9 = vector.multi_reduction <maximumf>, %8, %cst_8 [1] : vector<8x4xf32> to vector<8xf32>
    %10 = vector.shape_cast %9 : vector<8xf32> to vector<8x1xf32>
    %11 = vector.broadcast %10 : vector<8x1xf32> to vector<8x4xf32>
    %12 = arith.subf %8, %11 : vector<8x4xf32>
    %13 = math.exp %12 : vector<8x4xf32>
    %cst_9 = arith.constant dense<0.000000e+00> : vector<8xf32>
    %14 = vector.multi_reduction <add>, %13, %cst_9 [1] : vector<8x4xf32> to vector<8xf32>
    %15 = vector.shape_cast %14 : vector<8xf32> to vector<8x1xf32>
    %16 = tpu.reciprocal %15 {approx = true} : vector<8x1xf32> -> vector<8x1xf32>
    %17 = vector.broadcast %16 : vector<8x1xf32> to vector<8x4xf32>
    %18 = arith.mulf %13, %17 : vector<8x4xf32>
    %19 = arith.truncf %18 : vector<8x4xf32> to vector<8x4xbf16>
    %c0_10 = arith.constant 0 : index
    %c0_11 = arith.constant 0 : index
    %c0_12 = arith.constant 0 : index
    %c0_13 = arith.constant 0 : index
    %20 = vector.load %arg4[%c0_10, %c0_11, %c0_12, %c0_13] : memref<1x1x4x8xf32, #tpu.memory_space<vmem>>, vector<1x1x4x8xf32>
    %21 = vector.shape_cast %20 : vector<1x1x4x8xf32> to vector<4x8xf32>
    %22 = arith.truncf %21 : vector<4x8xf32> to vector<4x8xbf16>
    %cst_14 = arith.constant dense<0.000000e+00> : vector<8x8xf32>
    %23 = tpu.matmul %19, %22, %cst_14 {dimension_numbers = #tpu.dot_dimension_numbers<[1], [0], [0], [1], [0, 0, 1, 1], [], []>} : vector<8x4xbf16>, vector<4x8xbf16>, vector<8x8xf32> -> vector<8x8xf32>
    %c0_15 = arith.constant 0 : index
    %c0_16 = arith.constant 0 : index
    %c0_17 = arith.constant 0 : index
    %c0_18 = arith.constant 0 : index
    %24 = vector.load %arg5[%c0_15, %c0_16, %c0_17, %c0_18] : memref<1x1x8x8xf32, #tpu.memory_space<vmem>>, vector<1x1x8x8xf32>
    %25 = vector.shape_cast %24 : vector<1x1x8x8xf32> to vector<8x8xf32>
    %26 = vector.shape_cast %23 : vector<8x8xf32> to vector<1x1x8x8xf32>
    tpu.vector_store %arg5[%c0_15, %c0_16, %c0_17, %c0_18], %26 {strides = array<i32>} : memref<1x1x8x8xf32, #tpu.memory_space<vmem>>, vector<1x1x8x8xf32>,
    return
  }
  func.func @transform_0(%arg0: i32, %arg1: i32) -> (i32, i32, i32, i32) {
    %c0_i32 = arith.constant 0 : i32
    %c0_i32_0 = arith.constant 0 : i32
    %c0_i32_1 = arith.constant 0 : i32
    return %arg0, %arg1, %c0_i32, %c0_i32_0 : i32, i32, i32, i32
  }
  func.func @transform_1(%arg0: i32, %arg1: i32) -> (i32, i32, i32, i32) {
    %c0_i32 = arith.constant 0 : i32
    %c0_i32_0 = arith.constant 0 : i32
    %c0_i32_1 = arith.constant 0 : i32
    return %arg0, %arg1, %c0_i32, %c0_i32_0 : i32, i32, i32, i32
  }
  func.func @transform_2(%arg0: i32, %arg1: i32) -> (i32, i32, i32, i32) {
    %c0_i32 = arith.constant 0 : i32
    %c0_i32_0 = arith.constant 0 : i32
    %c0_i32_1 = arith.constant 0 : i32
    return %arg0, %arg1, %c0_i32, %c0_i32_0 : i32, i32, i32, i32
  }
  func.func @transform_3(%arg0: i32, %arg1: i32) -> (i32, i32, i32, i32) {
    %c0_i32 = arith.constant 0 : i32
    %c0_i32_0 = arith.constant 0 : i32
    %c0_i32_1 = arith.constant 0 : i32
    return %arg0, %arg1, %c0_i32, %c0_i32_0 : i32, i32, i32, i32
  }
}

module attributes {stable_mosaic.version = 11 : i64} {
  func.func @_attn_aux_kernel(%arg0: i32, %arg1: i32, %arg2: memref<1x1x8x8xf32, #tpu.memory_space<vmem>>, %arg3: memref<1x1x8x8xf32, #tpu.memory_space<vmem>>, %arg4: memref<1x1x8x8xf32, #tpu.memory_space<vmem>>, %arg5: memref<1x1x8x8xf32, #tpu.memory_space<vmem>>) attributes {dimension_semantics = [#tpu.dimension_semantics<parallel>, #tpu.dimension_semantics<parallel>], iteration_bounds = array<i64: 2, 4>, scalar_prefetch = 0 : i64, scratch_operands = 0 : i64, tpu.core_type = #tpu.core_type<tc>, window_params = [{transform_indices = @transform_0, window_bounds = array<i64: 1, 1, 8, 8>}, {transform_indices = @transform_1, window_bounds = array<i64: 1, 1, 8, 8>}, {transform_indices = @transform_2, window_bounds = array<i64: 1, 1, 8, 8>}, {transform_indices = @transform_3, window_bounds = array<i64: 1, 1, 8, 8>}]} {
    %c0 = arith.constant 0 : index
    %c0_0 = arith.constant 0 : index
    %c0_1 = arith.constant 0 : index
    %c0_2 = arith.constant 0 : index
    %0 = vector.load %arg2[%c0, %c0_0, %c0_1, %c0_2] : memref<1x1x8x8xf32, #tpu.memory_space<vmem>>, vector<1x1x8x8xf32>
    %1 = vector.shape_cast %0 : vector<1x1x8x8xf32> to vector<8x8xf32>
    %2 = arith.truncf %1 : vector<8x8xf32> to vector<8x8xbf16>
    %c0_3 = arith.constant 0 : index
    %c0_4 = arith.constant 0 : index
    %c0_5 = arith.constant 0 : index
    %c0_6 = arith.constant 0 : index
    %3 = vector.load %arg3[%c0_3, %c0_4, %c0_5, %c0_6] : memref<1x1x8x8xf32, #tpu.memory_space<vmem>>, vector<1x1x8x8xf32>
    %4 = vector.shape_cast %3 : vector<1x1x8x8xf32> to vector<8x8xf32>
    %5 = arith.truncf %4 : vector<8x8xf32> to vector<8x8xbf16>
    %cst = arith.constant dense<0.000000e+00> : vector<8x8xf32>
    %6 = tpu.matmul %2, %5, %cst {dimension_numbers = #tpu.dot_dimension_numbers<[1], [1], [0], [0], [0, 0, 1, 0], [], []>} : vector<8x8xbf16>, vector<8x8xbf16>, vector<8x8xf32> -> vector<8x8xf32>
    %cst_7 = arith.constant 0.353553385 : f32
    %7 = vector.broadcast %cst_7 : f32 to vector<8x8xf32>
    %8 = arith.mulf %6, %7 : vector<8x8xf32>
    %cst_8 = arith.constant dense<0xFF800000> : vector<8xf32>
    %9 = vector.multi_reduction <maximumf>, %8, %cst_8 [1] : vector<8x8xf32> to vector<8xf32>
    %10 = vector.shape_cast %9 : vector<8xf32> to vector<8x1xf32>
    %11 = vector.broadcast %10 : vector<8x1xf32> to vector<8x8xf32>
    %12 = arith.subf %8, %11 : vector<8x8xf32>
    %13 = math.exp %12 : vector<8x8xf32>
    %cst_9 = arith.constant dense<0.000000e+00> : vector<8xf32>
    %14 = vector.multi_reduction <add>, %13, %cst_9 [1] : vector<8x8xf32> to vector<8xf32>
    %15 = vector.shape_cast %14 : vector<8xf32> to vector<8x1xf32>
    %16 = tpu.reciprocal %15 {approx = true} : vector<8x1xf32> -> vector<8x1xf32>
    %17 = vector.broadcast %16 : vector<8x1xf32> to vector<8x8xf32>
    %18 = arith.mulf %13, %17 : vector<8x8xf32>
    %19 = arith.truncf %18 : vector<8x8xf32> to vector<8x8xbf16>
    %c0_10 = arith.constant 0 : index
    %c0_11 = arith.constant 0 : index
    %c0_12 = arith.constant 0 : index
    %c0_13 = arith.constant 0 : index
    %20 = vector.load %arg4[%c0_10, %c0_11, %c0_12, %c0_13] : memref<1x1x8x8xf32, #tpu.memory_space<vmem>>, vector<1x1x8x8xf32>
    %21 = vector.shape_cast %20 : vector<1x1x8x8xf32> to vector<8x8xf32>
    %22 = arith.truncf %21 : vector<8x8xf32> to vector<8x8xbf16>
    %cst_14 = arith.constant dense<0.000000e+00> : vector<8x8xf32>
    %23 = tpu.matmul %19, %22, %cst_14 {dimension_numbers = #tpu.dot_dimension_numbers<[1], [0], [0], [1], [0, 0, 1, 1], [], []>} : vector<8x8xbf16>, vector<8x8xbf16>, vector<8x8xf32> -> vector<8x8xf32>
    %c0_15 = arith.constant 0 : index
    %c0_16 = arith.constant 0 : index
    %c0_17 = arith.constant 0 : index
    %c0_18 = arith.constant 0 : index
    %24 = vector.load %arg5[%c0_15, %c0_16, %c0_17, %c0_18] : memref<1x1x8x8xf32, #tpu.memory_space<vmem>>, vector<1x1x8x8xf32>
    %25 = vector.shape_cast %24 : vector<1x1x8x8xf32> to vector<8x8xf32>
    %26 = vector.shape_cast %23 : vector<8x8xf32> to vector<1x1x8x8xf32>
    tpu.vector_store %arg5[%c0_15, %c0_16, %c0_17, %c0_18], %26 {strides = array<i32>} : memref<1x1x8x8xf32, #tpu.memory_space<vmem>>, vector<1x1x8x8xf32>,
    return
  }
  func.func @transform_0(%arg0: i32, %arg1: i32) -> (i32, i32, i32, i32) {
    %c0_i32 = arith.constant 0 : i32
    %c0_i32_0 = arith.constant 0 : i32
    %c0_i32_1 = arith.constant 0 : i32
    return %arg0, %arg1, %c0_i32, %c0_i32_0 : i32, i32, i32, i32
  }
  func.func @transform_1(%arg0: i32, %arg1: i32) -> (i32, i32, i32, i32) {
    %c0_i32 = arith.constant 0 : i32
    %c0_i32_0 = arith.constant 0 : i32
    %c0_i32_1 = arith.constant 0 : i32
    return %arg0, %arg1, %c0_i32, %c0_i32_0 : i32, i32, i32, i32
  }
  func.func @transform_2(%arg0: i32, %arg1: i32) -> (i32, i32, i32, i32) {
    %c0_i32 = arith.constant 0 : i32
    %c0_i32_0 = arith.constant 0 : i32
    %c0_i32_1 = arith.constant 0 : i32
    return %arg0, %arg1, %c0_i32, %c0_i32_0 : i32, i32, i32, i32
  }
  func.func @transform_3(%arg0: i32, %arg1: i32) -> (i32, i32, i32, i32) {
    %c0_i32 = arith.constant 0 : i32
    %c0_i32_0 = arith.constant 0 : i32
    %c0_i32_1 = arith.constant 0 : i32
    return %arg0, %arg1, %c0_i32, %c0_i32_0 : i32, i32, i32, i32
  }
}

</mosaic_0001>

<llo_original>
// kernel: my_memory_attention.12
$region0: #{my_memory_attention.12}
  #allocation0 [shape = 'u32[]', space=smem, size = 0x4, offset = 0x4, fixed_abs, tag = 'smem constant byte address 0x4 - core index']
  #allocation1 [shape = 'u32[144,128]{1,0:T(1,128)}', space=vmem, size = 0x12000, scoped, tag = 'internal scratch']
  #allocation2 [shape = 'f32[40,128]{1,0:T(8,128)}', space=vmem, size = 0x5000, scoped, tag = 'scratch operand']
  %s0 = inlined_call_operand.vmem [shape: f32[40,128], index: 0, kind: input, shape index: {}]
  %s1 = inlined_call_operand.vmem [shape: f32[128,128], index: 1, kind: input, shape index: {}]
  %s2 = inlined_call_operand.vmem [shape: f32[1,128], index: 2, kind: input, shape index: {}]
  %s3 = inlined_call_operand.vmem [shape: f32[40,128], index: 3, kind: output, shape index: {}]
  %s4 = sld [smem:[#allocation0]]
  $region30: #{my_memory_attention.12} parent=0
    _
  %s6 = ssub.s32 1, %s4
  %s7 = scalar_select 0, %s6, %s4
  // Predicated region
  $region2: #{my_memory_attention.12} parent=0 // pred_check
    _
  $region3: #{my_memory_attention.12} parent=0 // pred_check_branch
    %9 = sbr.rel (0) target = $region5
  $region4: #{my_memory_attention.12} parent=0 // pred_region
    _
  $region5: #{my_memory_attention.12} parent=0 // pred_fallthru
    _
  // Predicated region
  $region6: #{my_memory_attention.12} parent=0 // pred_check
    _
  $region7: #{my_memory_attention.12} parent=0 // pred_check_branch
    %11 = sbr.rel (0) target = $region9
  $region8: #{my_memory_attention.12} parent=0 // pred_region
    _
  $region9: #{my_memory_attention.12} parent=0 // pred_fallthru
    _
  // Predicated region
  $region10: #{my_memory_attention.12} parent=0 // pred_check
    _
  $region11: #{my_memory_attention.12} parent=0 // pred_check_branch
    %13 = sbr.rel (0) target = $region13
  $region12: #{my_memory_attention.12} parent=0 // pred_region
    _
  $region13: #{my_memory_attention.12} parent=0 // pred_fallthru
    _
  %p15 = scmp.eq.s32.totalorder 0, 0
  // Predicated region
  $region14: #{my_memory_attention.12} parent=0 // pred_check
    %p16 = pneg %p15
  $region15: #{my_memory_attention.12} parent=0 // pred_check_branch
    %18 = sbr.rel (%p16) target = $region17
  $region16: #{my_memory_attention.12} parent=0 // pred_region
    %19 = vst [vmem:[#allocation2] sm:$0xff] 0.0
    %20 = vst [vmem:[#allocation2 + $0x8] sm:$0xff] 0.0
    %21 = vst [vmem:[#allocation2 + $0x10] sm:$0xff] 0.0
    %22 = vst [vmem:[#allocation2 + $0x18] sm:$0xff] 0.0
    %23 = vst [vmem:[#allocation2 + $0x20] sm:$0xff] 0.0
  $region17: #{my_memory_attention.12} parent=0 // pred_fallthru
    _
  %v24 = vld [vmem:[#allocation2] sm:$0xff]
  %v25 = vld [vmem:[#allocation2 + $0x8] sm:$0xff]
  %v26 = vld [vmem:[#allocation2 + $0x10] sm:$0xff]
  %v27 = vld [vmem:[#allocation2 + $0x18] sm:$0xff]
  %v28 = vld [vmem:[#allocation2 + $0x20] sm:$0xff]
  %v29 = vld [vmem:[%s0] sm:$0xff]
  %v30 = vld [vmem:[%s0 + $0x8] sm:$0xff]
  %v31 = vld [vmem:[%s0 + $0x10] sm:$0xff]
  %v32 = vld [vmem:[%s0 + $0x18] sm:$0xff]
  %v33 = vld [vmem:[%s0 + $0x20] sm:$0xff]
  %v34 = vpack.c.bf16 %v30, %v29
  %v35 = vpack.c.bf16 %v32, %v31
  %v36 = vpack.c.bf16 %v33, %v33
  %v37 = vld [vmem:[%s1] sm:$0xff]
  %v38 = vld [vmem:[%s1 + $0x8] sm:$0xff]
  %v39 = vld [vmem:[%s1 + $0x10] sm:$0xff]
  %v40 = vld [vmem:[%s1 + $0x18] sm:$0xff]
  %v41 = vld [vmem:[%s1 + $0x20] sm:$0xff]
  %v42 = vld [vmem:[%s1 + $0x28] sm:$0xff]
  %v43 = vld [vmem:[%s1 + $0x30] sm:$0xff]
  %v44 = vld [vmem:[%s1 + $0x38] sm:$0xff]
  %v45 = vld [vmem:[%s1 + $0x40] sm:$0xff]
  %v46 = vld [vmem:[%s1 + $0x48] sm:$0xff]
  %v47 = vld [vmem:[%s1 + $0x50] sm:$0xff]
  %v48 = vld [vmem:[%s1 + $0x58] sm:$0xff]
  %v49 = vld [vmem:[%s1 + $0x60] sm:$0xff]
  %v50 = vld [vmem:[%s1 + $0x68] sm:$0xff]
  %v51 = vld [vmem:[%s1 + $0x70] sm:$0xff]
  %v52 = vld [vmem:[%s1 + $0x78] sm:$0xff]
  %v53 = vpack.c.bf16 %v38, %v37
  %v54 = vpack.c.bf16 %v40, %v39
  %v55 = vpack.c.bf16 %v42, %v41
  %v56 = vpack.c.bf16 %v44, %v43
  %v57 = vpack.c.bf16 %v46, %v45
  %v58 = vpack.c.bf16 %v48, %v47
  %v59 = vpack.c.bf16 %v50, %v49
  %v60 = vpack.c.bf16 %v52, %v51
  %61 = vmatprep.subr.bf16.mxu0 0
  %62 = vmatpush1.bf16.msra.mxu0 %v60
  %63 = vmatprep.subr.bf16.mxu0 0
  %64 = vmatpush1.bf16.msra.mxu0 %v59
  %65 = vmatprep.subr.bf16.mxu0 0
  %66 = vmatpush1.bf16.msra.mxu0 %v58
  %67 = vmatprep.subr.bf16.mxu0 0
  %68 = vmatpush1.bf16.msra.mxu0 %v57
  %69 = vmatprep.subr.bf16.mxu0 0
  %70 = vmatpush1.bf16.msra.mxu0 %v56
  %71 = vmatprep.subr.bf16.mxu0 0
  %72 = vmatpush1.bf16.msra.mxu0 %v55
  %73 = vmatprep.subr.bf16.mxu0 0
  %74 = vmatpush1.bf16.msra.mxu0 %v54
  %75 = vmatprep.subr.bf16.mxu0 0
  %76 = vmatpush1.bf16.msra.mxu0 %v53
  %77 = vmatprep.subr.bf16.mxu0 0
  %78 = vmatpush2.bf16.msra.mxu0 0
  %79 = vmatprep.subr.bf16.mxu0 0
  %80 = vmatpush2.bf16.msra.mxu0 0
  %81 = vmatprep.subr.bf16.mxu0 0
  %82 = vmatpush2.bf16.msra.mxu0 0
  %83 = vmatprep.subr.bf16.mxu0 0
  %84 = vmatpush2.bf16.msra.mxu0 0
  %85 = vmatprep.subr.bf16.mxu0 0
  %86 = vmatpush2.bf16.msra.mxu0 0
  %87 = vmatprep.subr.bf16.mxu0 0
  %88 = vmatpush2.bf16.msra.mxu0 0
  %89 = vmatprep.subr.bf16.mxu0 0
  %90 = vmatpush2.bf16.msra.mxu0 0
  %91 = vmatprep.subr.bf16.mxu0 0
  %92 = vmatpush2.bf16.msra.mxu0 0
  %93 = vmatprep.mubr.bf16.mxu0 0
  %94 = vmatmul.mubr.bf16.gmra.mxu0 %v34
  %v95 = vpop.f32.mrf.mxu0
  %v96 = vadd.f32 0.0, %v95
  %v97 = vpop.f32.mrf.mxu0
  %v98 = vpop.f32.mrf.mxu0
  %v99 = vadd.f32 0.0, %v98
  %v100 = vpop.f32.mrf.mxu0
  %101 = vmatprep.mubr.bf16.mxu0 0
  %102 = vmatmul.mubr.bf16.gmra.mxu0 %v35
  %v103 = vpop.f32.mrf.mxu0
  %v104 = vadd.f32 0.0, %v103
  %v105 = vpop.f32.mrf.mxu0
  %v106 = vpop.f32.mrf.mxu0
  %v107 = vadd.f32 0.0, %v106
  %v108 = vpop.f32.mrf.mxu0
  %109 = vmatprep.mubr.bf16.mxu0 0
  %110 = vmatmul.mubr.bf16.gmra.mxu0 %v36
  %v111 = vpop.f32.mrf.mxu0
  %v112 = vadd.f32 0.0, %v111
  %v113 = vpop.f32.mrf.mxu0
  %v114 = vpop.f32.mrf.mxu0
  %v115 = vpop.f32.mrf.mxu0
  %116 = vdwg.mxu0
  %v117 = vadd.f32 %v24, %v96
  %v118 = vadd.f32 %v25, %v99
  %v119 = vadd.f32 %v26, %v104
  %v120 = vadd.f32 %v27, %v107
  %v121 = vadd.f32 %v28, %v112
  %122 = vst [vmem:[#allocation2] sm:$0xff] %v117
  %123 = vst [vmem:[#allocation2 + $0x8] sm:$0xff] %v118
  %124 = vst [vmem:[#allocation2 + $0x10] sm:$0xff] %v119
  %125 = vst [vmem:[#allocation2 + $0x18] sm:$0xff] %v120
  %126 = vst [vmem:[#allocation2 + $0x20] sm:$0xff] %v121
  // Predicated region
  $region18: #{my_memory_attention.12} parent=0 // pred_check
    %p127 = pneg %p15
  $region19: #{my_memory_attention.12} parent=0 // pred_check_branch
    %129 = sbr.rel (%p127) target = $region21
  $region20: #{my_memory_attention.12} parent=0 // pred_region
    %v130 = vld [vmem:[#allocation2] sm:$0xff]
    %v131 = vld [vmem:[#allocation2 + $0x8] sm:$0xff]
    %v132 = vld [vmem:[#allocation2 + $0x10] sm:$0xff]
    %v133 = vld [vmem:[#allocation2 + $0x18] sm:$0xff]
    %v134 = vld [vmem:[#allocation2 + $0x20] sm:$0xff]
    %v135 = vld [vmem:[%s2] sm:$0x1]
    %v137 = vlaneseq
    %v138 = vshrl.u32 %v137, 7
    %v139 = vsub.s32 0, %v138
    %v140 = vrot.slane %v135, %v139
    %v142 = vadd.f32 %v130, %v140
    %v143 = vadd.f32 %v131, %v140
    %v144 = vadd.f32 %v132, %v140
    %v145 = vadd.f32 %v133, %v140
    %v146 = vadd.f32 %v134, %v140
    %147 = vst [vmem:[%s3] sm:$0xff] %v142
    %148 = vst [vmem:[%s3 + $0x8] sm:$0xff] %v143
    %149 = vst [vmem:[%s3 + $0x10] sm:$0xff] %v144
    %150 = vst [vmem:[%s3 + $0x18] sm:$0xff] %v145
    %151 = vst [vmem:[%s3 + $0x20] sm:$0xff] %v146
  $region21: #{my_memory_attention.12} parent=0 // pred_fallthru
    _
  // Predicated region
  $region22: #{my_memory_attention.12} parent=0 // pred_check
    _
  $region23: #{my_memory_attention.12} parent=0 // pred_check_branch
    %153 = sbr.rel (0) target = $region25
  $region24: #{my_memory_attention.12} parent=0 // pred_region
    _
  $region25: #{my_memory_attention.12} parent=0 // pred_fallthru
    _
  // Predicated region
  $region26: #{my_memory_attention.12} parent=0 // pred_check
    _
  $region27: #{my_memory_attention.12} parent=0 // pred_check_branch
    %155 = sbr.rel (0) target = $region29
  $region28: #{my_memory_attention.12} parent=0 // pred_region
    _
  $region29: #{my_memory_attention.12} parent=0 // pred_fallthru
    _

// kernel: my_memory_attention.11
$region0: #{my_memory_attention.11}
  #allocation0 [shape = 'u32[]', space=smem, size = 0x4, offset = 0x4, fixed_abs, tag = 'smem constant byte address 0x4 - core index']
  #allocation1 [shape = 'u32[144,128]{1,0:T(1,128)}', space=vmem, size = 0x12000, scoped, tag = 'internal scratch']
  #allocation2 [shape = 'f32[16,128]{1,0:T(8,128)}', space=vmem, size = 0x2000, scoped, tag = 'scratch operand']
  %s0 = inlined_call_operand.vmem [shape: f32[16,128], index: 0, kind: input, shape index: {}]
  %s1 = inlined_call_operand.vmem [shape: f32[128,128], index: 1, kind: input, shape index: {}]
  %s2 = inlined_call_operand.vmem [shape: f32[1,128], index: 2, kind: input, shape index: {}]
  %s3 = inlined_call_operand.vmem [shape: f32[16,128], index: 3, kind: output, shape index: {}]
  %s4 = sld [smem:[#allocation0]]
  $region30: #{my_memory_attention.11} parent=0
    _
  %s6 = ssub.s32 1, %s4
  %s7 = scalar_select 0, %s6, %s4
  // Predicated region
  $region2: #{my_memory_attention.11} parent=0 // pred_check
    _
  $region3: #{my_memory_attention.11} parent=0 // pred_check_branch
    %9 = sbr.rel (0) target = $region5
  $region4: #{my_memory_attention.11} parent=0 // pred_region
    _
  $region5: #{my_memory_attention.11} parent=0 // pred_fallthru
    _
  // Predicated region
  $region6: #{my_memory_attention.11} parent=0 // pred_check
    _
  $region7: #{my_memory_attention.11} parent=0 // pred_check_branch
    %11 = sbr.rel (0) target = $region9
  $region8: #{my_memory_attention.11} parent=0 // pred_region
    _
  $region9: #{my_memory_attention.11} parent=0 // pred_fallthru
    _
  // Predicated region
  $region10: #{my_memory_attention.11} parent=0 // pred_check
    _
  $region11: #{my_memory_attention.11} parent=0 // pred_check_branch
    %13 = sbr.rel (0) target = $region13
  $region12: #{my_memory_attention.11} parent=0 // pred_region
    _
  $region13: #{my_memory_attention.11} parent=0 // pred_fallthru
    _
  %p15 = scmp.eq.s32.totalorder 0, 0
  // Predicated region
  $region14: #{my_memory_attention.11} parent=0 // pred_check
    %p16 = pneg %p15
  $region15: #{my_memory_attention.11} parent=0 // pred_check_branch
    %18 = sbr.rel (%p16) target = $region17
  $region16: #{my_memory_attention.11} parent=0 // pred_region
    %19 = vst [vmem:[#allocation2] sm:$0xff] 0.0
    %20 = vst [vmem:[#allocation2 + $0x8] sm:$0xff] 0.0
  $region17: #{my_memory_attention.11} parent=0 // pred_fallthru
    _
  %v21 = vld [vmem:[#allocation2] sm:$0xff]
  %v22 = vld [vmem:[#allocation2 + $0x8] sm:$0xff]
  %v23 = vld [vmem:[%s0] sm:$0xff]
  %v24 = vld [vmem:[%s0 + $0x8] sm:$0xff]
  %v25 = vpack.c.bf16 %v24, %v23
  %v26 = vld [vmem:[%s1] sm:$0xff]
  %v27 = vld [vmem:[%s1 + $0x8] sm:$0xff]
  %v28 = vld [vmem:[%s1 + $0x10] sm:$0xff]
  %v29 = vld [vmem:[%s1 + $0x18] sm:$0xff]
  %v30 = vld [vmem:[%s1 + $0x20] sm:$0xff]
  %v31 = vld [vmem:[%s1 + $0x28] sm:$0xff]
  %v32 = vld [vmem:[%s1 + $0x30] sm:$0xff]
  %v33 = vld [vmem:[%s1 + $0x38] sm:$0xff]
  %v34 = vld [vmem:[%s1 + $0x40] sm:$0xff]
  %v35 = vld [vmem:[%s1 + $0x48] sm:$0xff]
  %v36 = vld [vmem:[%s1 + $0x50] sm:$0xff]
  %v37 = vld [vmem:[%s1 + $0x58] sm:$0xff]
  %v38 = vld [vmem:[%s1 + $0x60] sm:$0xff]
  %v39 = vld [vmem:[%s1 + $0x68] sm:$0xff]
  %v40 = vld [vmem:[%s1 + $0x70] sm:$0xff]
  %v41 = vld [vmem:[%s1 + $0x78] sm:$0xff]
  %v42 = vpack.c.bf16 %v27, %v26
  %v43 = vpack.c.bf16 %v29, %v28
  %v44 = vpack.c.bf16 %v31, %v30
  %v45 = vpack.c.bf16 %v33, %v32
  %v46 = vpack.c.bf16 %v35, %v34
  %v47 = vpack.c.bf16 %v37, %v36
  %v48 = vpack.c.bf16 %v39, %v38
  %v49 = vpack.c.bf16 %v41, %v40
  %50 = vmatprep.subr.bf16.mxu0 0
  %51 = vmatpush1.bf16.msra.mxu0 %v49
  %52 = vmatprep.subr.bf16.mxu0 0
  %53 = vmatpush1.bf16.msra.mxu0 %v48
  %54 = vmatprep.subr.bf16.mxu0 0
  %55 = vmatpush1.bf16.msra.mxu0 %v47
  %56 = vmatprep.subr.bf16.mxu0 0
  %57 = vmatpush1.bf16.msra.mxu0 %v46
  %58 = vmatprep.subr.bf16.mxu0 0
  %59 = vmatpush1.bf16.msra.mxu0 %v45
  %60 = vmatprep.subr.bf16.mxu0 0
  %61 = vmatpush1.bf16.msra.mxu0 %v44
  %62 = vmatprep.subr.bf16.mxu0 0
  %63 = vmatpush1.bf16.msra.mxu0 %v43
  %64 = vmatprep.subr.bf16.mxu0 0
  %65 = vmatpush1.bf16.msra.mxu0 %v42
  %66 = vmatprep.subr.bf16.mxu0 0
  %67 = vmatpush2.bf16.msra.mxu0 0
  %68 = vmatprep.subr.bf16.mxu0 0
  %69 = vmatpush2.bf16.msra.mxu0 0
  %70 = vmatprep.subr.bf16.mxu0 0
  %71 = vmatpush2.bf16.msra.mxu0 0
  %72 = vmatprep.subr.bf16.mxu0 0
  %73 = vmatpush2.bf16.msra.mxu0 0
  %74 = vmatprep.subr.bf16.mxu0 0
  %75 = vmatpush2.bf16.msra.mxu0 0
  %76 = vmatprep.subr.bf16.mxu0 0
  %77 = vmatpush2.bf16.msra.mxu0 0
  %78 = vmatprep.subr.bf16.mxu0 0
  %79 = vmatpush2.bf16.msra.mxu0 0
  %80 = vmatprep.subr.bf16.mxu0 0
  %81 = vmatpush2.bf16.msra.mxu0 0
  %82 = vmatprep.mubr.bf16.mxu0 0
  %83 = vmatmul.mubr.bf16.gmra.mxu0 %v25
  %v84 = vpop.f32.mrf.mxu0
  %v85 = vadd.f32 0.0, %v84
  %v86 = vpop.f32.mrf.mxu0
  %v87 = vpop.f32.mrf.mxu0
  %v88 = vadd.f32 0.0, %v87
  %v89 = vpop.f32.mrf.mxu0
  %90 = vdwg.mxu0
  %v91 = vadd.f32 %v21, %v85
  %v92 = vadd.f32 %v22, %v88
  %93 = vst [vmem:[#allocation2] sm:$0xff] %v91
  %94 = vst [vmem:[#allocation2 + $0x8] sm:$0xff] %v92
  // Predicated region
  $region18: #{my_memory_attention.11} parent=0 // pred_check
    %p95 = pneg %p15
  $region19: #{my_memory_attention.11} parent=0 // pred_check_branch
    %97 = sbr.rel (%p95) target = $region21
  $region20: #{my_memory_attention.11} parent=0 // pred_region
    %v98 = vld [vmem:[#allocation2] sm:$0xff]
    %v99 = vld [vmem:[#allocation2 + $0x8] sm:$0xff]
    %v100 = vld [vmem:[%s2] sm:$0x1]
    %v102 = vlaneseq
    %v103 = vshrl.u32 %v102, 7
    %v104 = vsub.s32 0, %v103
    %v105 = vrot.slane %v100, %v104
    %v107 = vadd.f32 %v98, %v105
    %v108 = vadd.f32 %v99, %v105
    %109 = vst [vmem:[%s3] sm:$0xff] %v107
    %110 = vst [vmem:[%s3 + $0x8] sm:$0xff] %v108
  $region21: #{my_memory_attention.11} parent=0 // pred_fallthru
    _
  // Predicated region
  $region22: #{my_memory_attention.11} parent=0 // pred_check
    _
  $region23: #{my_memory_attention.11} parent=0 // pred_check_branch
    %112 = sbr.rel (0) target = $region25
  $region24: #{my_memory_attention.11} parent=0 // pred_region
    _
  $region25: #{my_memory_attention.11} parent=0 // pred_fallthru
    _
  // Predicated region
  $region26: #{my_memory_attention.11} parent=0 // pred_check
    _
  $region27: #{my_memory_attention.11} parent=0 // pred_check_branch
    %114 = sbr.rel (0) target = $region29
  $region28: #{my_memory_attention.11} parent=0 // pred_region
    _
  $region29: #{my_memory_attention.11} parent=0 // pred_fallthru
    _

// kernel: my_memory_attention.13
$region0: #{my_memory_attention.13}
  #allocation0 [shape = 'u32[]', space=smem, size = 0x4, offset = 0x4, fixed_abs, tag = 'smem constant byte address 0x4 - core index']
  #allocation1 [shape = 'u32[144,128]{1,0:T(1,128)}', space=vmem, size = 0x12000, scoped, tag = 'internal scratch']
  %s0 = inlined_call_operand.vmem [shape: f32[2,4,8,8], index: 0, kind: input, shape index: {}]
  %s1 = inlined_call_operand.vmem [shape: f32[2,4,20,8], index: 1, kind: input, shape index: {}]
  %s2 = inlined_call_operand.vmem [shape: f32[2,4,20,8], index: 2, kind: input, shape index: {}]
  %s3 = inlined_call_operand.vmem [shape: f32[2,8,1], index: 3, kind: input, shape index: {}]
  %s4 = inlined_call_operand.vmem [shape: f32[2,1,20], index: 4, kind: input, shape index: {}]
  %s5 = inlined_call_operand.vmem [shape: f32[2,4,8,20], index: 5, kind: input, shape index: {}]
  %s6 = inlined_call_operand.vmem [shape: f32[2,4,8,8], index: 6, kind: output, shape index: {0}]
  %s7 = inlined_call_operand.hbm [shape: f32[2,4,8,20], index: 7, kind: output, shape index: {1}]
  %8 = xla_tuple %s6, %s7
  %s9 = sld [smem:[#allocation0]]
  $region65: #{my_memory_attention.13} parent=0
    _
  %s11 = ssub.s32 1, %s9
  %s12 = scalar_select 0, %s11, %s9
  $region1: #{my_memory_attention.13} parent=0
    #allocation2 [shape = 'u8[8192]{0}', space=vmem, size = 0x2000, scoped, tag = 'output window, operand 1']
    #allocation3 [shape = 's32[2]{0}', space=sflag, size = 0x8, scoped, tag = 'scoped memory for my_memory_attention.13']
    %13 = vsyncpa [#allocation3], 0
    %s14 = scalar_lea.sflag [#allocation3], 1
    %15 = vsyncpa %s14, 0
    loop: start=0, step=1, limit=10
    $region2: #{my_memory_attention.13} parent=1 // loop_pre_header
      _
    $region3: #{my_memory_attention.13} parent=1 // loop_header
      %s17 = sphi 0, %s21
      %p18 = scmp.ge.s32.totalorder %s17, 10
      %s24 = sphi 0, %s36
      %s25 = sphi 0, %s32
      %s26 = sphi 0, %s24
      %s27 = sphi 0, %s25
      %s28 = sphi 0, %s26
      %s29 = sphi 0, %s27
      %s41 = sphi 0, %s43
      %s44 = sphi 0, %s41
      %s45 = sphi 0, %s44
      %s61 = sphi 0, %s45
      %s69 = sphi 0, %s71
      %s72 = sphi 0, %s69
      %s73 = sphi 0, %s72
      %s89 = sphi 0, %s73
      %s97 = sphi 0, %s99
      %s100 = sphi 0, %s97
      %s101 = sphi 0, %s100
      %s117 = sphi 0, %s101
      %s123 = sphi 0, %s125
      %s126 = sphi 0, %s123
      %s127 = sphi 0, %s126
      %s143 = sphi 0, %s127
      %s149 = sphi 0, %s151
      %s152 = sphi 0, %s149
      %s153 = sphi 0, %s152
      %s169 = sphi 0, %s153
      %s177 = sphi 0, %s179
      %s180 = sphi 0, %s177
      %s181 = sphi 0, %s180
      %s197 = sphi 0, %s181
      %s205 = sphi 0, %s207
      %s208 = sphi 0, %s205
      %s209 = sphi 0, %s208
      %s225 = sphi 0, %s209
      %s233 = sphi 0, %s235
      %s236 = sphi 0, %s233
      %s237 = sphi 0, %s236
      %s253 = sphi 0, %s237
    $region4: #{my_memory_attention.13} parent=1 // loop_header_branch
      %20 = sbr.rel (%p18) target = $region8
    $region5: #{my_memory_attention.13} parent=1 // loop_body
      %s22 = ssub.s32 %s17, 1
      %s23 = ssub.s32 %s17, 2
      %s30 = sadd.s32 1, %s25
      %p31 = scmp.ge.s32.totalorder %s30, 4
      %s32 = scalar_select %p31, 0, %s30
      %s33 = sadd.s32 1, %s24
      %s34 = scalar_select %p31, %s33, %s24
      %p35 = scmp.ge.s32.totalorder %s34, 2
      %s36 = scalar_select %p35, 0, %s34
      %s37 = ssub.s32 %s24, %s36
      %s38 = ssub.s32 %s25, %s32
      %s39 = sor.u32 %s37, %s38
      %p40 = scmp.eq.s32.totalorder %s39, 0
      %s42 = sadd.s32 %s41, 1
      %s43 = scalar_select %p40, %s41, %s42
      %p46 = pneg %p40
      %p47 = scmp.eq.s32.totalorder %s17, 7
      %p48 = por %p46, %p47
      %p49 = scmp.ne.s32.totalorder %s41, %s44
      %p50 = scmp.eq.s32.totalorder %s17, 0
      %p51 = por %p49, %p50
      %p52 = scmp.ne.s32.totalorder %s41, %s44
      %p53 = scmp.eq.s32.totalorder %s22, 7
      %p54 = por %p52, %p53
      %p55 = scmp.ne.s32.totalorder %s44, %s45
      %p56 = scmp.eq.s32.totalorder %s22, 0
      %p57 = por %p55, %p56
      %p58 = scmp.ne.s32.totalorder %s44, %s45
      %p59 = scmp.eq.s32.totalorder %s23, 7
      %p60 = por %p58, %p59
      %p62 = scmp.ne.s32.totalorder %s45, %s61
      %p63 = scmp.eq.s32.totalorder %s23, 0
      %p64 = por %p62, %p63
      %s65 = ssub.s32 %s24, %s36
      %s66 = ssub.s32 %s25, %s32
      %s67 = sor.u32 %s65, %s66
      %p68 = scmp.eq.s32.totalorder %s67, 0
      %s70 = sadd.s32 %s69, 1
      %s71 = scalar_select %p68, %s69, %s70
      %p74 = pneg %p68
      %p75 = scmp.eq.s32.totalorder %s17, 7
      %p76 = por %p74, %p75
      %p77 = scmp.ne.s32.totalorder %s69, %s72
      %p78 = scmp.eq.s32.totalorder %s17, 0
      %p79 = por %p77, %p78
      %p80 = scmp.ne.s32.totalorder %s69, %s72
      %p81 = scmp.eq.s32.totalorder %s22, 7
      %p82 = por %p80, %p81
      %p83 = scmp.ne.s32.totalorder %s72, %s73
      %p84 = scmp.eq.s32.totalorder %s22, 0
      %p85 = por %p83, %p84
      %p86 = scmp.ne.s32.totalorder %s72, %s73
      %p87 = scmp.eq.s32.totalorder %s23, 7
      %p88 = por %p86, %p87
      %p90 = scmp.ne.s32.totalorder %s73, %s89
      %p91 = scmp.eq.s32.totalorder %s23, 0
      %p92 = por %p90, %p91
      %s93 = ssub.s32 %s24, %s36
      %s94 = ssub.s32 %s25, %s32
      %s95 = sor.u32 %s93, %s94
      %p96 = scmp.eq.s32.totalorder %s95, 0
      %s98 = sadd.s32 %s97, 1
      %s99 = scalar_select %p96, %s97, %s98
      %p102 = pneg %p96
      %p103 = scmp.eq.s32.totalorder %s17, 7
      %p104 = por %p102, %p103
      %p105 = scmp.ne.s32.totalorder %s97, %s100
      %p106 = scmp.eq.s32.totalorder %s17, 0
      %p107 = por %p105, %p106
      %p108 = scmp.ne.s32.totalorder %s97, %s100
      %p109 = scmp.eq.s32.totalorder %s22, 7
      %p110 = por %p108, %p109
      %p111 = scmp.ne.s32.totalorder %s100, %s101
      %p112 = scmp.eq.s32.totalorder %s22, 0
      %p113 = por %p111, %p112
      %p114 = scmp.ne.s32.totalorder %s100, %s101
      %p115 = scmp.eq.s32.totalorder %s23, 7
      %p116 = por %p114, %p115
      %p118 = scmp.ne.s32.totalorder %s101, %s117
      %p119 = scmp.eq.s32.totalorder %s23, 0
      %p120 = por %p118, %p119
      %s121 = ssub.s32 %s24, %s36
      %p122 = scmp.eq.s32.totalorder %s121, 0
      %s124 = sadd.s32 %s123, 1
      %s125 = scalar_select %p122, %s123, %s124
      %p128 = pneg %p122
      %p129 = scmp.eq.s32.totalorder %s17, 7
      %p130 = por %p128, %p129
      %p131 = scmp.ne.s32.totalorder %s123, %s126
      %p132 = scmp.eq.s32.totalorder %s17, 0
      %p133 = por %p131, %p132
      %p134 = scmp.ne.s32.totalorder %s123, %s126
      %p135 = scmp.eq.s32.totalorder %s22, 7
      %p136 = por %p134, %p135
      %p137 = scmp.ne.s32.totalorder %s126, %s127
      %p138 = scmp.eq.s32.totalorder %s22, 0
      %p139 = por %p137, %p138
      %p140 = scmp.ne.s32.totalorder %s126, %s127
      %p141 = scmp.eq.s32.totalorder %s23, 7
      %p142 = por %p140, %p141
      %p144 = scmp.ne.s32.totalorder %s127, %s143
      %p145 = scmp.eq.s32.totalorder %s23, 0
      %p146 = por %p144, %p145
      %s147 = ssub.s32 %s24, %s36
      %p148 = scmp.eq.s32.totalorder %s147, 0
      %s150 = sadd.s32 %s149, 1
      %s151 = scalar_select %p148, %s149, %s150
      %p154 = pneg %p148
      %p155 = scmp.eq.s32.totalorder %s17, 7
      %p156 = por %p154, %p155
      %p157 = scmp.ne.s32.totalorder %s149, %s152
      %p158 = scmp.eq.s32.totalorder %s17, 0
      %p159 = por %p157, %p158
      %p160 = scmp.ne.s32.totalorder %s149, %s152
      %p161 = scmp.eq.s32.totalorder %s22, 7
      %p162 = por %p160, %p161
      %p163 = scmp.ne.s32.totalorder %s152, %s153
      %p164 = scmp.eq.s32.totalorder %s22, 0
      %p165 = por %p163, %p164
      %p166 = scmp.ne.s32.totalorder %s152, %s153
      %p167 = scmp.eq.s32.totalorder %s23, 7
      %p168 = por %p166, %p167
      %p170 = scmp.ne.s32.totalorder %s153, %s169
      %p171 = scmp.eq.s32.totalorder %s23, 0
      %p172 = por %p170, %p171
      %s173 = ssub.s32 %s24, %s36
      %s174 = ssub.s32 %s25, %s32
      %s175 = sor.u32 %s173, %s174
      %p176 = scmp.eq.s32.totalorder %s175, 0
      %s178 = sadd.s32 %s177, 1
      %s179 = scalar_select %p176, %s177, %s178
      %p182 = pneg %p176
      %p183 = scmp.eq.s32.totalorder %s17, 7
      %p184 = por %p182, %p183
      %p185 = scmp.ne.s32.totalorder %s177, %s180
      %p186 = scmp.eq.s32.totalorder %s17, 0
      %p187 = por %p185, %p186
      %p188 = scmp.ne.s32.totalorder %s177, %s180
      %p189 = scmp.eq.s32.totalorder %s22, 7
      %p190 = por %p188, %p189
      %p191 = scmp.ne.s32.totalorder %s180, %s181
      %p192 = scmp.eq.s32.totalorder %s22, 0
      %p193 = por %p191, %p192
      %p194 = scmp.ne.s32.totalorder %s180, %s181
      %p195 = scmp.eq.s32.totalorder %s23, 7
      %p196 = por %p194, %p195
      %p198 = scmp.ne.s32.totalorder %s181, %s197
      %p199 = scmp.eq.s32.totalorder %s23, 0
      %p200 = por %p198, %p199
      %s201 = ssub.s32 %s24, %s36
      %s202 = ssub.s32 %s25, %s32
      %s203 = sor.u32 %s201, %s202
      %p204 = scmp.eq.s32.totalorder %s203, 0
      %s206 = sadd.s32 %s205, 1
      %s207 = scalar_select %p204, %s205, %s206
      %p210 = pneg %p204
      %p211 = scmp.eq.s32.totalorder %s17, 7
      %p212 = por %p210, %p211
      %p213 = scmp.ne.s32.totalorder %s205, %s208
      %p214 = scmp.eq.s32.totalorder %s17, 0
      %p215 = por %p213, %p214
      %p216 = scmp.ne.s32.totalorder %s205, %s208
      %p217 = scmp.eq.s32.totalorder %s22, 7
      %p218 = por %p216, %p217
      %p219 = scmp.ne.s32.totalorder %s208, %s209
      %p220 = scmp.eq.s32.totalorder %s22, 0
      %p221 = por %p219, %p220
      %p222 = scmp.ne.s32.totalorder %s208, %s209
      %p223 = scmp.eq.s32.totalorder %s23, 7
      %p224 = por %p222, %p223
      %p226 = scmp.ne.s32.totalorder %s209, %s225
      %p227 = scmp.eq.s32.totalorder %s23, 0
      %p228 = por %p226, %p227
      %s229 = ssub.s32 %s24, %s36
      %s230 = ssub.s32 %s25, %s32
      %s231 = sor.u32 %s229, %s230
      %p232 = scmp.eq.s32.totalorder %s231, 0
      %s234 = sadd.s32 %s233, 1
      %s235 = scalar_select %p232, %s233, %s234
      %p238 = pneg %p232
      %p239 = scmp.eq.s32.totalorder %s17, 7
      %p240 = por %p238, %p239
      %p241 = scmp.ne.s32.totalorder %s233, %s236
      %p242 = scmp.eq.s32.totalorder %s17, 0
      %p243 = por %p241, %p242
      %p244 = scmp.ne.s32.totalorder %s233, %s236
      %p245 = scmp.eq.s32.totalorder %s22, 7
      %p246 = por %p244, %p245
      %p247 = scmp.ne.s32.totalorder %s236, %s237
      %p248 = scmp.eq.s32.totalorder %s22, 0
      %p249 = por %p247, %p248
      %p250 = scmp.ne.s32.totalorder %s236, %s237
      %p251 = scmp.eq.s32.totalorder %s23, 7
      %p252 = por %p250, %p251
      %p254 = scmp.ne.s32.totalorder %s237, %s253
      %p255 = scmp.eq.s32.totalorder %s23, 0
      %p256 = por %p254, %p255
      %p257 = scmp.le.s32.totalorder 1, %s17
      %p258 = scmp.lt.s32.totalorder %s17, 9
      %p259 = pnand %p257, %p258
      %p260 = pneg %p259
      // Predicated region
      $region9: #{my_memory_attention.13} parent=5 // pred_check
        _
      $region10: #{my_memory_attention.13} parent=5 // pred_check_branch
        %262 = sbr.rel (%p259) target = $region12
      $region11: #{my_memory_attention.13} parent=5 // pred_region
        %s263 = ssub.s32 %s17, 1
      $region12: #{my_memory_attention.13} parent=5 // pred_fallthru
        _
      %p264 = scmp.lt.s32.totalorder %s17, 8
      // Predicated region
      $region13: #{my_memory_attention.13} parent=5 // pred_check
        %p265 = pneg %p264
      $region14: #{my_memory_attention.13} parent=5 // pred_check_branch
        %267 = sbr.rel (%p265) target = $region16
      $region15: #{my_memory_attention.13} parent=5 // pred_region
        // Predicated region
        $region17: #{my_memory_attention.13} parent=15 // pred_check
          %p268 = pneg %p51
        $region18: #{my_memory_attention.13} parent=15 // pred_check_branch
          %270 = sbr.rel (%p268) target = $region20
        $region19: #{my_memory_attention.13} parent=15 // pred_region
          %p271 = scmp.lt.s32.totalorder %s24, 1
          %s272 = scalar_select %p271, %s24, 1
          %p273 = scmp.lt.s32.totalorder %s25, 3
          %s274 = scalar_select %p273, %s25, 3
          %s275 = smul.addr %s272, 4
          %s276 = sadd.s32 %s274, %s275
          %s277 = smul.addr %s276, 8
          %s278 = scalar_lea.vmem %s0, %s277
        $region20: #{my_memory_attention.13} parent=15 // pred_fallthru
          _
        // Predicated region
        $region21: #{my_memory_attention.13} parent=15 // pred_check
          %p279 = pneg %p79
        $region22: #{my_memory_attention.13} parent=15 // pred_check_branch
          %281 = sbr.rel (%p279) target = $region24
        $region23: #{my_memory_attention.13} parent=15 // pred_region
          %p282 = scmp.lt.s32.totalorder %s24, 1
          %s283 = scalar_select %p282, %s24, 1
          %p284 = scmp.lt.s32.totalorder %s25, 3
          %s285 = scalar_select %p284, %s25, 3
          %s286 = smul.addr %s285, 3
          %s287 = smul.addr %s283, 12
          %s288 = sadd.s32 %s286, %s287
          %s289 = smul.addr %s288, 8
          %s290 = scalar_lea.vmem %s1, %s289
        $region24: #{my_memory_attention.13} parent=15 // pred_fallthru
          _
        // Predicated region
        $region25: #{my_memory_attention.13} parent=15 // pred_check
          %p291 = pneg %p107
        $region26: #{my_memory_attention.13} parent=15 // pred_check_branch
          %293 = sbr.rel (%p291) target = $region28
        $region27: #{my_memory_attention.13} parent=15 // pred_region
          %p294 = scmp.lt.s32.totalorder %s24, 1
          %s295 = scalar_select %p294, %s24, 1
          %p296 = scmp.lt.s32.totalorder %s25, 3
          %s297 = scalar_select %p296, %s25, 3
          %s298 = smul.addr %s297, 3
          %s299 = smul.addr %s295, 12
          %s300 = sadd.s32 %s298, %s299
          %s301 = smul.addr %s300, 8
          %s302 = scalar_lea.vmem %s2, %s301
        $region28: #{my_memory_attention.13} parent=15 // pred_fallthru
          _
        // Predicated region
        $region29: #{my_memory_attention.13} parent=15 // pred_check
          %p303 = pneg %p133
        $region30: #{my_memory_attention.13} parent=15 // pred_check_branch
          %305 = sbr.rel (%p303) target = $region32
        $region31: #{my_memory_attention.13} parent=15 // pred_region
          %p306 = scmp.lt.s32.totalorder %s24, 1
          %s307 = scalar_select %p306, %s24, 1
          %s308 = smul.addr %s307, 8
          %s309 = scalar_lea.vmem %s3, %s308
        $region32: #{my_memory_attention.13} parent=15 // pred_fallthru
          _
        // Predicated region
        $region33: #{my_memory_attention.13} parent=15 // pred_check
          %p310 = pneg %p159
        $region34: #{my_memory_attention.13} parent=15 // pred_check_branch
          %312 = sbr.rel (%p310) target = $region36
        $region35: #{my_memory_attention.13} parent=15 // pred_region
          %p313 = scmp.lt.s32.totalorder %s24, 1
          %s314 = scalar_select %p313, %s24, 1
          %s315 = scalar_lea.vmem %s4, %s314
        $region36: #{my_memory_attention.13} parent=15 // pred_fallthru
          _
        // Predicated region
        $region37: #{my_memory_attention.13} parent=15 // pred_check
          %p316 = pneg %p187
        $region38: #{my_memory_attention.13} parent=15 // pred_check_branch
          %318 = sbr.rel (%p316) target = $region40
        $region39: #{my_memory_attention.13} parent=15 // pred_region
          %p319 = scmp.lt.s32.totalorder %s24, 1
          %s320 = scalar_select %p319, %s24, 1
          %p321 = scmp.lt.s32.totalorder %s25, 3
          %s322 = scalar_select %p321, %s25, 3
          %s323 = smul.addr %s320, 4
          %s324 = sadd.s32 %s322, %s323
          %s325 = smul.addr %s324, 8
          %s326 = scalar_lea.vmem %s5, %s325
        $region40: #{my_memory_attention.13} parent=15 // pred_fallthru
          _
      $region16: #{my_memory_attention.13} parent=5 // pred_fallthru
        _
      %p327 = scmp.le.s32.totalorder 1, %s17
      %p328 = scmp.lt.s32.totalorder %s17, 9
      %p329 = pnand %p327, %p328
      %p330 = pneg %p329
      // Predicated region
      $region41: #{my_memory_attention.13} parent=5 // pred_check
        _
      $region42: #{my_memory_attention.13} parent=5 // pred_check_branch
        %332 = sbr.rel (%p329) target = $region44
      $region43: #{my_memory_attention.13} parent=5 // pred_region
        %s333 = ssub.s32 %s17, 1
        %p334 = scmp.lt.s32.totalorder %s26, 1
        %s335 = scalar_select %p334, %s26, 1
        %p336 = scmp.lt.s32.totalorder %s27, 3
        %s337 = scalar_select %p336, %s27, 3
        %s338 = smul.addr %s335, 4
        %s339 = sadd.s32 %s337, %s338
        %s340 = smul.addr %s339, 8
        %s341 = scalar_lea.vmem %s0, %s340
        %p342 = pneg %p57
        %p343 = pneg %p54
        %p344 = scmp.lt.s32.totalorder %s26, 1
        %s345 = scalar_select %p344, %s26, 1
        %p346 = scmp.lt.s32.totalorder %s27, 3
        %s347 = scalar_select %p346, %s27, 3
        %s348 = smul.addr %s347, 3
        %s349 = smul.addr %s345, 12
        %s350 = sadd.s32 %s348, %s349
        %s351 = smul.addr %s350, 8
        %s352 = scalar_lea.vmem %s1, %s351
        %p353 = pneg %p85
        %p354 = pneg %p82
        %p355 = scmp.lt.s32.totalorder %s26, 1
        %s356 = scalar_select %p355, %s26, 1
        %p357 = scmp.lt.s32.totalorder %s27, 3
        %s358 = scalar_select %p357, %s27, 3
        %s359 = smul.addr %s358, 3
        %s360 = smul.addr %s356, 12
        %s361 = sadd.s32 %s359, %s360
        %s362 = smul.addr %s361, 8
        %s363 = scalar_lea.vmem %s2, %s362
        %p364 = pneg %p113
        %p365 = pneg %p110
        %p366 = scmp.lt.s32.totalorder %s26, 1
        %s367 = scalar_select %p366, %s26, 1
        %s368 = smul.addr %s367, 8
        %s369 = scalar_lea.vmem %s3, %s368
        %p370 = pneg %p139
        %p371 = pneg %p136
        %p372 = scmp.lt.s32.totalorder %s26, 1
        %s373 = scalar_select %p372, %s26, 1
        %s374 = scalar_lea.vmem %s4, %s373
        %p375 = pneg %p165
        %p376 = pneg %p162
        %p377 = scmp.lt.s32.totalorder %s26, 1
        %s378 = scalar_select %p377, %s26, 1
        %p379 = scmp.lt.s32.totalorder %s27, 3
        %s380 = scalar_select %p379, %s27, 3
        %s381 = smul.addr %s378, 4
        %s382 = sadd.s32 %s380, %s381
        %s383 = smul.addr %s382, 8
        %s384 = scalar_lea.vmem %s5, %s383
        %p385 = pneg %p193
        %p386 = pneg %p190
        %p387 = pneg %p221
        %p388 = pneg %p218
        %p389 = scmp.lt.s32.totalorder %s26, 1
        %s390 = scalar_select %p389, %s26, 1
        %p391 = scmp.lt.s32.totalorder %s27, 3
        %s392 = scalar_select %p391, %s27, 3
        %s393 = smul.addr %s390, 4
        %s394 = sadd.s32 %s392, %s393
        %s395 = smul.addr %s394, 8
        %s396 = scalar_lea.vmem %s6, %s395
        %p397 = pneg %p249
        %p398 = pneg %p246
        %s399 = sand.u32 %s236, 1
        %s400 = scalar_lea.sflag [#allocation3], %s399
        %s401 = sand.u32 %s236, 1
        %s402 = smul.addr %s401, 8
        %s403 = scalar_lea.vmem [#allocation2], %s402
        %p404 = scmp.lt.s32.totalorder %s26, 1
        %s405 = scalar_select %p404, %s26, 1
        %p406 = scmp.lt.s32.totalorder %s27, 3
        %s407 = scalar_select %p406, %s27, 3
        %s408 = smul.addr %s405, 4
        %s409 = sadd.s32 %s407, %s408
        %s410 = smul.addr %s409, 8
        %s411 = scalar_lea.vmem %s0, %s410
        %p412 = scmp.lt.s32.totalorder %s26, 1
        %s413 = scalar_select %p412, %s26, 1
        %p414 = scmp.lt.s32.totalorder %s27, 3
        %s415 = scalar_select %p414, %s27, 3
        %s416 = smul.addr %s415, 3
        %s417 = smul.addr %s413, 12
        %s418 = sadd.s32 %s416, %s417
        %s419 = smul.addr %s418, 8
        %s420 = scalar_lea.vmem %s1, %s419
        %p421 = scmp.lt.s32.totalorder %s26, 1
        %s422 = scalar_select %p421, %s26, 1
        %p423 = scmp.lt.s32.totalorder %s27, 3
        %s424 = scalar_select %p423, %s27, 3
        %s425 = smul.addr %s424, 3
        %s426 = smul.addr %s422, 12
        %s427 = sadd.s32 %s425, %s426
        %s428 = smul.addr %s427, 8
        %s429 = scalar_lea.vmem %s2, %s428
        %p430 = scmp.lt.s32.totalorder %s26, 1
        %s431 = scalar_select %p430, %s26, 1
        %s432 = smul.addr %s431, 8
        %s433 = scalar_lea.vmem %s3, %s432
        %p434 = scmp.lt.s32.totalorder %s26, 1
        %s435 = scalar_select %p434, %s26, 1
        %s436 = scalar_lea.vmem %s4, %s435
        %p437 = scmp.lt.s32.totalorder %s26, 1
        %s438 = scalar_select %p437, %s26, 1
        %p439 = scmp.lt.s32.totalorder %s27, 3
        %s440 = scalar_select %p439, %s27, 3
        %s441 = smul.addr %s438, 4
        %s442 = sadd.s32 %s440, %s441
        %s443 = smul.addr %s442, 8
        %s444 = scalar_lea.vmem %s5, %s443
        %p445 = scmp.lt.s32.totalorder %s26, 1
        %s446 = scalar_select %p445, %s26, 1
        %p447 = scmp.lt.s32.totalorder %s27, 3
        %s448 = scalar_select %p447, %s27, 3
        %s449 = smul.addr %s446, 4
        %s450 = sadd.s32 %s448, %s449
        %s451 = smul.addr %s450, 8
        %s452 = scalar_lea.vmem %s6, %s451
        %v454 = vld [vmem:[%s411] sm:$0xff]
        %v455 = vpack.c.bf16 %v454, %v454
        %v456 = vld [vmem:[%s420] sm:$0xff]
        %v457 = vld [vmem:[%s420 + $0x8] sm:$0xff]
        %v458 = vld [vmem:[%s420 + $0x10] sm:$0xf]
        %v459 = vpack.c.bf16 %v457, %v456
        %v460 = vpack.c.bf16 %v458, %v458
        %vm461 = vcmask 64512
        %v463 = vsel %vm461, %v455, 0
        %v466 = vsel %vm461, %v459, 0
        %v469 = vsel %vm461, %v460, 0
        %471 = vmatprep.subr.bf16.mxu0 0
        %472 = vmatpush1.bf16.xpose.msra.mxu0 0
        %473 = vmatprep.subr.bf16.mxu0 0
        %474 = vmatpush1.bf16.xpose.msra.mxu0 0
        %475 = vmatprep.subr.bf16.mxu0 0
        %476 = vmatpush1.bf16.xpose.msra.mxu0 0
        %477 = vmatprep.subr.bf16.mxu0 0
        %478 = vmatpush1.bf16.xpose.msra.mxu0 0
        %479 = vmatprep.subr.bf16.mxu0 0
        %480 = vmatpush1.bf16.xpose.msra.mxu0 0
        %481 = vmatprep.subr.bf16.mxu0 0
        %482 = vmatpush1.bf16.xpose.msra.mxu0 0
        %483 = vmatprep.subr.bf16.mxu0 0
        %484 = vmatpush1.bf16.xpose.msra.mxu0 %v469
        %485 = vmatprep.subr.bf16.mxu0 0
        %486 = vmatpush1.bf16.xpose.msra.mxu0 %v466
        %487 = vmatprep.subr.bf16.mxu0 0
        %488 = vmatpush2.bf16.xpose.msra.mxu0 0
        %489 = vmatprep.subr.bf16.mxu0 0
        %490 = vmatpush2.bf16.xpose.msra.mxu0 0
        %491 = vmatprep.subr.bf16.mxu0 0
        %492 = vmatpush2.bf16.xpose.msra.mxu0 0
        %493 = vmatprep.subr.bf16.mxu0 0
        %494 = vmatpush2.bf16.xpose.msra.mxu0 0
        %495 = vmatprep.subr.bf16.mxu0 0
        %496 = vmatpush2.bf16.xpose.msra.mxu0 0
        %497 = vmatprep.subr.bf16.mxu0 0
        %498 = vmatpush2.bf16.xpose.msra.mxu0 0
        %499 = vmatprep.subr.bf16.mxu0 0
        %500 = vmatpush2.bf16.xpose.msra.mxu0 0
        %501 = vmatprep.subr.bf16.mxu0 0
        %502 = vmatpush2.bf16.xpose.msra.mxu0 0
        %503 = vmatprep.mubr.bf16.mxu0 0
        %504 = vmatmul.mubr.bf16.gmra.mxu0 %v463
        %v505 = vpop.f32.mrf.mxu0
        %v506 = vadd.f32 0.0, %v505
        %v507 = vpop.f32.mrf.mxu0
        %v508 = vpop.f32.mrf.mxu0
        %v509 = vpop.f32.mrf.mxu0
        %510 = vdwg.mxu0
        %v511 = vmul.f32 %v506, 0.35355338
        %v512 = vld [vmem:[%s444] sm:$0xff]
        %v513 = vadd.f32 %v511, %v512
        %v514 = vlaneseq
        %v515 = vand.u32 %v514, 127
        %v516 = vld [vmem:[%s433] sm:$0xff]
        %v517 = vld [vmem:[%s436] sm:$0x1]
        %vm518 = vcmp.lt.s32.totalorder %v515, 12
        %520 = vset.pattern.permute.xlu0 0
        %521 = vperm.xlu0 %520, %v516
        %v522 = vpop.permute.xlu0 %521
        %v524 = vsel %vm518, 1.0, %v522
        %v526 = vlaneseq
        %v527 = vshrl.u32 %v526, 7
        %v528 = vsub.s32 0, %v527
        %v529 = vrot.slane %v517, %v528
        %v531 = vmul.f32 %v524, %v529
        %vm532 = vcmp.gt.f32.partialorder %v531, 0.0
        %v533 = vsel %vm532, %v513, -1e+09
        %vm534 = vcmask 162816
        %v535 = vsel %vm534, %v533, -inf
        %536 = vmax.xlane.f32.xlu0 %v535
        %v537 = vpop.xlane.xlu0 %536
        %v538 = vsub.f32 %v533, %v537
        %v539 = vmul.f32 %v538, 1.442695
        %v540 = vpow.pop %v539
        %v541 = vsel %vm534, %v540, 0.0
        %542 = vadd.xlane.f32.xlu0 %v541
        %v543 = vpop.xlane.xlu0 %542
        %v544 = vrcp.pop %v543
        %v545 = vmul.f32 %v540, %v544
        %v546 = vpack.c.bf16 %v545, %v545
        %v547 = vld [vmem:[%s429] sm:$0xff]
        %v548 = vld [vmem:[%s429 + $0x8] sm:$0xff]
        %v549 = vld [vmem:[%s429 + $0x10] sm:$0xf]
        %v550 = vpack.c.bf16 %v548, %v547
        %v551 = vpack.c.bf16 %v549, %v549
        %v553 = vsel %vm534, %v546, 0
        %vm555 = vcmask 1041408
        %v557 = vsel %vm555, %v551, 0
        %559 = vmatprep.subr.bf16.mxu0 0
        %560 = vmatpush1.bf16.msra.mxu0 0
        %561 = vmatprep.subr.bf16.mxu0 0
        %562 = vmatpush1.bf16.msra.mxu0 0
        %563 = vmatprep.subr.bf16.mxu0 0
        %564 = vmatpush1.bf16.msra.mxu0 0
        %565 = vmatprep.subr.bf16.mxu0 0
        %566 = vmatpush1.bf16.msra.mxu0 0
        %567 = vmatprep.subr.bf16.mxu0 0
        %568 = vmatpush1.bf16.msra.mxu0 0
        %569 = vmatprep.subr.bf16.mxu0 0
        %570 = vmatpush1.bf16.msra.mxu0 0
        %571 = vmatprep.subr.bf16.mxu0 0
        %572 = vmatpush1.bf16.msra.mxu0 %v557
        %573 = vmatprep.subr.bf16.mxu0 0
        %574 = vmatpush1.bf16.msra.mxu0 %v550
        %575 = vmatprep.subr.bf16.mxu0 0
        %576 = vmatpush2.bf16.msra.mxu0 0
        %577 = vmatprep.subr.bf16.mxu0 0
        %578 = vmatpush2.bf16.msra.mxu0 0
        %579 = vmatprep.subr.bf16.mxu0 0
        %580 = vmatpush2.bf16.msra.mxu0 0
        %581 = vmatprep.subr.bf16.mxu0 0
        %582 = vmatpush2.bf16.msra.mxu0 0
        %583 = vmatprep.subr.bf16.mxu0 0
        %584 = vmatpush2.bf16.msra.mxu0 0
        %585 = vmatprep.subr.bf16.mxu0 0
        %586 = vmatpush2.bf16.msra.mxu0 0
        %587 = vmatprep.subr.bf16.mxu0 0
        %588 = vmatpush2.bf16.msra.mxu0 0
        %589 = vmatprep.subr.bf16.mxu0 0
        %590 = vmatpush2.bf16.msra.mxu0 0
        %591 = vmatprep.mubr.bf16.mxu0 0
        %592 = vmatmul.mubr.bf16.gmra.mxu0 %v553
        %v593 = vpop.f32.mrf.mxu0
        %v594 = vadd.f32 0.0, %v593
        %v595 = vpop.f32.mrf.mxu0
        %v596 = vpop.f32.mrf.mxu0
        %v597 = vpop.f32.mrf.mxu0
        %598 = vdwg.mxu0
        %599 = vst.msk [vmem:[%s452] sm:$0xff] %vm461, %v594
        %600 = vst.msk [vmem:[%s403] sm:$0xff] %vm534, %v545
        %p601 = scmp.lt.s32.totalorder %s26, 1
        %s602 = scalar_select %p601, %s26, 1
        %p603 = scmp.lt.s32.totalorder %s27, 3
        %s604 = scalar_select %p603, %s27, 3
        %s605 = smul.addr %s602, 4
        %s606 = sadd.s32 %s604, %s605
        %s607 = smul.addr %s606, 8
        %s608 = scalar_lea.vmem %s6, %s607
        %s609 = sand.u32 %s236, 1
        %s610 = scalar_lea.sflag [#allocation3], %s609
        %s611 = sand.u32 %s236, 1
        %s612 = smul.addr %s611, 8
        %s613 = scalar_lea.vmem [#allocation2], %s612
        // Predicated region
        $region45: #{my_memory_attention.13} parent=43 // pred_check
          %p614 = pneg %p218
        $region46: #{my_memory_attention.13} parent=43 // pred_check_branch
          %616 = sbr.rel (%p614) target = $region48
        $region47: #{my_memory_attention.13} parent=43 // pred_region
          _
        $region48: #{my_memory_attention.13} parent=43 // pred_fallthru
          _
        // Predicated region
        $region49: #{my_memory_attention.13} parent=43 // pred_check
          %p617 = pneg %p246
        $region50: #{my_memory_attention.13} parent=43 // pred_check_branch
          %619 = sbr.rel (%p617) target = $region52
        $region51: #{my_memory_attention.13} parent=43 // pred_region
          %s621 = ssub.s32 128, 128
          %622 = vsyncadd %s610, %s621
          %s623 = smul.addr %s26, 4
          %s624 = sadd.s32 %s27, %s623
          %s625 = smul.addr %s624, 128
          %s626 = scalar_lea.hbm %s7, %s625
          %s628 = sshll.u32 %s613, 4
          %s629 = int_to_ptr.vmem [resolvable:$true] %s628
          %631 = dma.vmem_to_hbm [thread:$0]  %s629, 128, %s626, %s610
        $region52: #{my_memory_attention.13} parent=43 // pred_fallthru
          _
      $region44: #{my_memory_attention.13} parent=5 // pred_fallthru
        _
      %p632 = scmp.le.s32.totalorder 2, %s17
      // Predicated region
      $region53: #{my_memory_attention.13} parent=5 // pred_check
        %p633 = pneg %p632
      $region54: #{my_memory_attention.13} parent=5 // pred_check_branch
        %635 = sbr.rel (%p633) target = $region56
      $region55: #{my_memory_attention.13} parent=5 // pred_region
        %s636 = ssub.s32 %s17, 2
        // Predicated region
        $region57: #{my_memory_attention.13} parent=55 // pred_check
          %p637 = pneg %p224
        $region58: #{my_memory_attention.13} parent=55 // pred_check_branch
          %639 = sbr.rel (%p637) target = $region60
        $region59: #{my_memory_attention.13} parent=55 // pred_region
          %p640 = scmp.lt.s32.totalorder %s28, 1
          %s641 = scalar_select %p640, %s28, 1
          %p642 = scmp.lt.s32.totalorder %s29, 3
          %s643 = scalar_select %p642, %s29, 3
          %s644 = smul.addr %s641, 4
          %s645 = sadd.s32 %s643, %s644
          %s646 = smul.addr %s645, 8
          %s647 = scalar_lea.vmem %s6, %s646
        $region60: #{my_memory_attention.13} parent=55 // pred_fallthru
          _
        // Predicated region
        $region61: #{my_memory_attention.13} parent=55 // pred_check
          %p648 = pneg %p252
        $region62: #{my_memory_attention.13} parent=55 // pred_check_branch
          %650 = sbr.rel (%p648) target = $region64
        $region63: #{my_memory_attention.13} parent=55 // pred_region
          %s651 = sand.u32 %s237, 1
          %s652 = scalar_lea.sflag [#allocation3], %s651
          %s653 = sand.u32 %s237, 1
          %s654 = smul.addr %s653, 8
          %s655 = scalar_lea.vmem [#allocation2], %s654
          %656 = dma.done %s652, 128
        $region64: #{my_memory_attention.13} parent=55 // pred_fallthru
          _
      $region56: #{my_memory_attention.13} parent=5 // pred_fallthru
        _
    $region6: #{my_memory_attention.13} parent=1 // loop_footer
      %s21 = sadd.s32 1, %s17
    $region7: #{my_memory_attention.13} parent=1 // loop_footer_branch
      %16 = sbr.rel target = $region3
    $region8: #{my_memory_attention.13} parent=1 // loop_exit
      _
    %657 = vsyncpa [#allocation3], 1
    %s658 = scalar_lea.sflag [#allocation3], 1
    %659 = vsyncpa %s658, 1

// kernel: my_memory_attention.15
$region0: #{my_memory_attention.15}
  #allocation0 [shape = 'u32[]', space=smem, size = 0x4, offset = 0x4, fixed_abs, tag = 'smem constant byte address 0x4 - core index']
  #allocation1 [shape = 'u32[144,128]{1,0:T(1,128)}', space=vmem, size = 0x12000, scoped, tag = 'internal scratch']
  %s0 = inlined_call_operand.vmem [shape: f32[16,32], index: 0, kind: input, shape index: {}]
  %s1 = inlined_call_operand.vmem [shape: f32[16,32], index: 1, kind: input, shape index: {}]
  %s2 = inlined_call_operand.vmem [shape: f32[1,32], index: 2, kind: input, shape index: {}]
  %s3 = inlined_call_operand.vmem [shape: f32[1,32], index: 3, kind: input, shape index: {}]
  %s4 = inlined_call_operand.vmem [shape: f32[16,32], index: 4, kind: output, shape index: {}]
  %s5 = sld [smem:[#allocation0]]
  $region26: #{my_memory_attention.15} parent=0
    _
  %s7 = ssub.s32 1, %s5
  %s8 = scalar_select 0, %s7, %s5
  // Predicated region
  $region2: #{my_memory_attention.15} parent=0 // pred_check
    _
  $region3: #{my_memory_attention.15} parent=0 // pred_check_branch
    %10 = sbr.rel (0) target = $region5
  $region4: #{my_memory_attention.15} parent=0 // pred_region
    _
  $region5: #{my_memory_attention.15} parent=0 // pred_fallthru
    _
  // Predicated region
  $region6: #{my_memory_attention.15} parent=0 // pred_check
    _
  $region7: #{my_memory_attention.15} parent=0 // pred_check_branch
    %12 = sbr.rel (0) target = $region9
  $region8: #{my_memory_attention.15} parent=0 // pred_region
    _
  $region9: #{my_memory_attention.15} parent=0 // pred_fallthru
    _
  // Predicated region
  $region10: #{my_memory_attention.15} parent=0 // pred_check
    _
  $region11: #{my_memory_attention.15} parent=0 // pred_check_branch
    %14 = sbr.rel (0) target = $region13
  $region12: #{my_memory_attention.15} parent=0 // pred_region
    _
  $region13: #{my_memory_attention.15} parent=0 // pred_fallthru
    _
  // Predicated region
  $region14: #{my_memory_attention.15} parent=0 // pred_check
    _
  $region15: #{my_memory_attention.15} parent=0 // pred_check_branch
    %16 = sbr.rel (0) target = $region17
  $region16: #{my_memory_attention.15} parent=0 // pred_region
    _
  $region17: #{my_memory_attention.15} parent=0 // pred_fallthru
    _
  %v17 = vld [vmem:[%s0] sm:$0xff]
  %v18 = vld [vmem:[%s0 + $0x8] sm:$0xff]
  %v19 = vld [vmem:[%s1] sm:$0xff]
  %v20 = vld [vmem:[%s1 + $0x8] sm:$0xff]
  %v21 = vadd.f32 %v17, %v19
  %v22 = vadd.f32 %v18, %v20
  %vm23 = vcmask 261120
  %v24 = vsel %vm23, %v21, 0.0
  %25 = vadd.xlane.f32.xlu0 %v24
  %v26 = vpop.xlane.xlu0 %25
  %v27 = vsel %vm23, %v22, 0.0
  %28 = vadd.xlane.f32.xlu0 %v27
  %v29 = vpop.xlane.xlu0 %28
  %v30 = vrcp.pop 32.0
  %v31 = vmul.f32 %v26, %v30
  %v32 = vmul.f32 %v29, %v30
  %v33 = vsub.f32 %v21, %v31
  %v34 = vsub.f32 %v22, %v32
  %v35 = vmul.f32 %v33, %v33
  %v36 = vmul.f32 %v34, %v34
  %v37 = vsel %vm23, %v35, 0.0
  %38 = vadd.xlane.f32.xlu0 %v37
  %v39 = vpop.xlane.xlu0 %38
  %v40 = vsel %vm23, %v36, 0.0
  %41 = vadd.xlane.f32.xlu0 %v40
  %v42 = vpop.xlane.xlu0 %41
  %v43 = vmul.f32 %v39, %v30
  %v44 = vmul.f32 %v42, %v30
  %v45 = vadd.f32 %v43, 1e-05
  %v46 = vadd.f32 %v44, 1e-05
  %v47 = vrsqrt.pop %v45
  %v48 = vrsqrt.pop %v46
  %v49 = vmul.f32 %v33, %v47
  %v50 = vmul.f32 %v34, %v48
  %v51 = vld [vmem:[%s2] sm:$0x1]
  %v53 = vlaneseq
  %v54 = vshrl.u32 %v53, 7
  %v55 = vsub.s32 0, %v54
  %v56 = vrot.slane %v51, %v55
  %v58 = vmul.f32 %v49, %v56
  %v59 = vmul.f32 %v50, %v56
  %v60 = vld [vmem:[%s3] sm:$0x1]
  %v62 = vlaneseq
  %v63 = vshrl.u32 %v62, 7
  %v64 = vsub.s32 0, %v63
  %v65 = vrot.slane %v60, %v64
  %v67 = vadd.f32 %v58, %v65
  %v68 = vadd.f32 %v59, %v65
  %69 = vst.msk [vmem:[%s4] sm:$0xff] %vm23, %v67
  %70 = vst.msk [vmem:[%s4 + $0x8] sm:$0xff] %vm23, %v68
  // Predicated region
  $region18: #{my_memory_attention.15} parent=0 // pred_check
    _
  $region19: #{my_memory_attention.15} parent=0 // pred_check_branch
    %72 = sbr.rel (0) target = $region21
  $region20: #{my_memory_attention.15} parent=0 // pred_region
    _
  $region21: #{my_memory_attention.15} parent=0 // pred_fallthru
    _
  // Predicated region
  $region22: #{my_memory_attention.15} parent=0 // pred_check
    _
  $region23: #{my_memory_attention.15} parent=0 // pred_check_branch
    %74 = sbr.rel (0) target = $region25
  $region24: #{my_memory_attention.15} parent=0 // pred_region
    _
  $region25: #{my_memory_attention.15} parent=0 // pred_fallthru
    _

// kernel: my_memory_attention.16
$region0: #{my_memory_attention.16}
  #allocation0 [shape = 'u32[]', space=smem, size = 0x4, offset = 0x4, fixed_abs, tag = 'smem constant byte address 0x4 - core index']
  #allocation1 [shape = 'u32[144,128]{1,0:T(1,128)}', space=vmem, size = 0x12000, scoped, tag = 'internal scratch']
  #allocation2 [shape = 'f32[8,128]{1,0:T(8,128)}', space=vmem, size = 0x1000, scoped, tag = 'scratch operand']
  %s0 = inlined_call_operand.vmem [shape: f32[8,128], index: 0, kind: input, shape index: {}]
  %s1 = inlined_call_operand.vmem [shape: f32[128,128], index: 1, kind: input, shape index: {}]
  %s2 = inlined_call_operand.vmem [shape: f32[1,128], index: 2, kind: input, shape index: {}]
  %s3 = inlined_call_operand.vmem [shape: f32[8,128], index: 3, kind: output, shape index: {}]
  %s4 = sld [smem:[#allocation0]]
  $region30: #{my_memory_attention.16} parent=0
    _
  %s6 = ssub.s32 1, %s4
  %s7 = scalar_select 0, %s6, %s4
  // Predicated region
  $region2: #{my_memory_attention.16} parent=0 // pred_check
    _
  $region3: #{my_memory_attention.16} parent=0 // pred_check_branch
    %9 = sbr.rel (0) target = $region5
  $region4: #{my_memory_attention.16} parent=0 // pred_region
    _
  $region5: #{my_memory_attention.16} parent=0 // pred_fallthru
    _
  // Predicated region
  $region6: #{my_memory_attention.16} parent=0 // pred_check
    _
  $region7: #{my_memory_attention.16} parent=0 // pred_check_branch
    %11 = sbr.rel (0) target = $region9
  $region8: #{my_memory_attention.16} parent=0 // pred_region
    _
  $region9: #{my_memory_attention.16} parent=0 // pred_fallthru
    _
  // Predicated region
  $region10: #{my_memory_attention.16} parent=0 // pred_check
    _
  $region11: #{my_memory_attention.16} parent=0 // pred_check_branch
    %13 = sbr.rel (0) target = $region13
  $region12: #{my_memory_attention.16} parent=0 // pred_region
    _
  $region13: #{my_memory_attention.16} parent=0 // pred_fallthru
    _
  %p15 = scmp.eq.s32.totalorder 0, 0
  // Predicated region
  $region14: #{my_memory_attention.16} parent=0 // pred_check
    %p16 = pneg %p15
  $region15: #{my_memory_attention.16} parent=0 // pred_check_branch
    %18 = sbr.rel (%p16) target = $region17
  $region16: #{my_memory_attention.16} parent=0 // pred_region
    %19 = vst [vmem:[#allocation2] sm:$0xff] 0.0
  $region17: #{my_memory_attention.16} parent=0 // pred_fallthru
    _
  %v20 = vld [vmem:[#allocation2] sm:$0xff]
  %v21 = vld [vmem:[%s0] sm:$0xff]
  %v22 = vpack.c.bf16 %v21, %v21
  %v23 = vld [vmem:[%s1] sm:$0xff]
  %v24 = vld [vmem:[%s1 + $0x8] sm:$0xff]
  %v25 = vld [vmem:[%s1 + $0x10] sm:$0xff]
  %v26 = vld [vmem:[%s1 + $0x18] sm:$0xff]
  %v27 = vld [vmem:[%s1 + $0x20] sm:$0xff]
  %v28 = vld [vmem:[%s1 + $0x28] sm:$0xff]
  %v29 = vld [vmem:[%s1 + $0x30] sm:$0xff]
  %v30 = vld [vmem:[%s1 + $0x38] sm:$0xff]
  %v31 = vld [vmem:[%s1 + $0x40] sm:$0xff]
  %v32 = vld [vmem:[%s1 + $0x48] sm:$0xff]
  %v33 = vld [vmem:[%s1 + $0x50] sm:$0xff]
  %v34 = vld [vmem:[%s1 + $0x58] sm:$0xff]
  %v35 = vld [vmem:[%s1 + $0x60] sm:$0xff]
  %v36 = vld [vmem:[%s1 + $0x68] sm:$0xff]
  %v37 = vld [vmem:[%s1 + $0x70] sm:$0xff]
  %v38 = vld [vmem:[%s1 + $0x78] sm:$0xff]
  %v39 = vpack.c.bf16 %v24, %v23
  %v40 = vpack.c.bf16 %v26, %v25
  %v41 = vpack.c.bf16 %v28, %v27
  %v42 = vpack.c.bf16 %v30, %v29
  %v43 = vpack.c.bf16 %v32, %v31
  %v44 = vpack.c.bf16 %v34, %v33
  %v45 = vpack.c.bf16 %v36, %v35
  %v46 = vpack.c.bf16 %v38, %v37
  %47 = vmatprep.subr.bf16.mxu0 0
  %48 = vmatpush1.bf16.msra.mxu0 %v46
  %49 = vmatprep.subr.bf16.mxu0 0
  %50 = vmatpush1.bf16.msra.mxu0 %v45
  %51 = vmatprep.subr.bf16.mxu0 0
  %52 = vmatpush1.bf16.msra.mxu0 %v44
  %53 = vmatprep.subr.bf16.mxu0 0
  %54 = vmatpush1.bf16.msra.mxu0 %v43
  %55 = vmatprep.subr.bf16.mxu0 0
  %56 = vmatpush1.bf16.msra.mxu0 %v42
  %57 = vmatprep.subr.bf16.mxu0 0
  %58 = vmatpush1.bf16.msra.mxu0 %v41
  %59 = vmatprep.subr.bf16.mxu0 0
  %60 = vmatpush1.bf16.msra.mxu0 %v40
  %61 = vmatprep.subr.bf16.mxu0 0
  %62 = vmatpush1.bf16.msra.mxu0 %v39
  %63 = vmatprep.subr.bf16.mxu0 0
  %64 = vmatpush2.bf16.msra.mxu0 0
  %65 = vmatprep.subr.bf16.mxu0 0
  %66 = vmatpush2.bf16.msra.mxu0 0
  %67 = vmatprep.subr.bf16.mxu0 0
  %68 = vmatpush2.bf16.msra.mxu0 0
  %69 = vmatprep.subr.bf16.mxu0 0
  %70 = vmatpush2.bf16.msra.mxu0 0
  %71 = vmatprep.subr.bf16.mxu0 0
  %72 = vmatpush2.bf16.msra.mxu0 0
  %73 = vmatprep.subr.bf16.mxu0 0
  %74 = vmatpush2.bf16.msra.mxu0 0
  %75 = vmatprep.subr.bf16.mxu0 0
  %76 = vmatpush2.bf16.msra.mxu0 0
  %77 = vmatprep.subr.bf16.mxu0 0
  %78 = vmatpush2.bf16.msra.mxu0 0
  %79 = vmatprep.mubr.bf16.mxu0 0
  %80 = vmatmul.mubr.bf16.gmra.mxu0 %v22
  %v81 = vpop.f32.mrf.mxu0
  %v82 = vadd.f32 0.0, %v81
  %v83 = vpop.f32.mrf.mxu0
  %v84 = vpop.f32.mrf.mxu0
  %v85 = vpop.f32.mrf.mxu0
  %86 = vdwg.mxu0
  %v87 = vadd.f32 %v20, %v82
  %88 = vst [vmem:[#allocation2] sm:$0xff] %v87
  // Predicated region
  $region18: #{my_memory_attention.16} parent=0 // pred_check
    %p89 = pneg %p15
  $region19: #{my_memory_attention.16} parent=0 // pred_check_branch
    %91 = sbr.rel (%p89) target = $region21
  $region20: #{my_memory_attention.16} parent=0 // pred_region
    %v92 = vld [vmem:[#allocation2] sm:$0xff]
    %v93 = vld [vmem:[%s2] sm:$0x1]
    %v95 = vlaneseq
    %v96 = vshrl.u32 %v95, 7
    %v97 = vsub.s32 0, %v96
    %v98 = vrot.slane %v93, %v97
    %v100 = vadd.f32 %v92, %v98
    %101 = vst [vmem:[%s3] sm:$0xff] %v100
  $region21: #{my_memory_attention.16} parent=0 // pred_fallthru
    _
  // Predicated region
  $region22: #{my_memory_attention.16} parent=0 // pred_check
    _
  $region23: #{my_memory_attention.16} parent=0 // pred_check_branch
    %103 = sbr.rel (0) target = $region25
  $region24: #{my_memory_attention.16} parent=0 // pred_region
    _
  $region25: #{my_memory_attention.16} parent=0 // pred_fallthru
    _
  // Predicated region
  $region26: #{my_memory_attention.16} parent=0 // pred_check
    _
  $region27: #{my_memory_attention.16} parent=0 // pred_check_branch
    %105 = sbr.rel (0) target = $region29
  $region28: #{my_memory_attention.16} parent=0 // pred_region
    _
  $region29: #{my_memory_attention.16} parent=0 // pred_fallthru
    _

// kernel: my_memory_attention.21
$region0: #{my_memory_attention.21}
  #allocation0 [shape = 'u32[]', space=smem, size = 0x4, offset = 0x4, fixed_abs, tag = 'smem constant byte address 0x4 - core index']
  #allocation1 [shape = 'u32[144,128]{1,0:T(1,128)}', space=vmem, size = 0x12000, scoped, tag = 'internal scratch']
  %s0 = inlined_call_operand.vmem [shape: f32[2,4,8,8], index: 0, kind: input, shape index: {}]
  %s1 = inlined_call_operand.vmem [shape: f32[2,4,4,8], index: 1, kind: input, shape index: {}]
  %s2 = inlined_call_operand.vmem [shape: f32[2,4,4,8], index: 2, kind: input, shape index: {}]
  %s3 = inlined_call_operand.vmem [shape: f32[2,4,8,8], index: 3, kind: output, shape index: {}]
  %s4 = sld [smem:[#allocation0]]
  $region45: #{my_memory_attention.21} parent=0
    _
  %s6 = ssub.s32 1, %s4
  %s7 = scalar_select 0, %s6, %s4
  loop: start=0, step=1, limit=10
  $region2: #{my_memory_attention.21} parent=0 // loop_pre_header
    _
  $region3: #{my_memory_attention.21} parent=0 // loop_header
    %s9 = sphi 0, %s13
    %p10 = scmp.ge.s32.totalorder %s9, 10
    %s16 = sphi 0, %s28
    %s17 = sphi 0, %s24
    %s18 = sphi 0, %s16
    %s19 = sphi 0, %s17
    %s20 = sphi 0, %s18
    %s21 = sphi 0, %s19
    %s33 = sphi 0, %s35
    %s36 = sphi 0, %s33
    %s37 = sphi 0, %s36
    %s53 = sphi 0, %s37
    %s61 = sphi 0, %s63
    %s64 = sphi 0, %s61
    %s65 = sphi 0, %s64
    %s81 = sphi 0, %s65
    %s89 = sphi 0, %s91
    %s92 = sphi 0, %s89
    %s93 = sphi 0, %s92
    %s109 = sphi 0, %s93
    %s117 = sphi 0, %s119
    %s120 = sphi 0, %s117
    %s121 = sphi 0, %s120
    %s137 = sphi 0, %s121
  $region4: #{my_memory_attention.21} parent=0 // loop_header_branch
    %12 = sbr.rel (%p10) target = $region8
  $region5: #{my_memory_attention.21} parent=0 // loop_body
    %s14 = ssub.s32 %s9, 1
    %s15 = ssub.s32 %s9, 2
    %s22 = sadd.s32 1, %s17
    %p23 = scmp.ge.s32.totalorder %s22, 4
    %s24 = scalar_select %p23, 0, %s22
    %s25 = sadd.s32 1, %s16
    %s26 = scalar_select %p23, %s25, %s16
    %p27 = scmp.ge.s32.totalorder %s26, 2
    %s28 = scalar_select %p27, 0, %s26
    %s29 = ssub.s32 %s16, %s28
    %s30 = ssub.s32 %s17, %s24
    %s31 = sor.u32 %s29, %s30
    %p32 = scmp.eq.s32.totalorder %s31, 0
    %s34 = sadd.s32 %s33, 1
    %s35 = scalar_select %p32, %s33, %s34
    %p38 = pneg %p32
    %p39 = scmp.eq.s32.totalorder %s9, 7
    %p40 = por %p38, %p39
    %p41 = scmp.ne.s32.totalorder %s33, %s36
    %p42 = scmp.eq.s32.totalorder %s9, 0
    %p43 = por %p41, %p42
    %p44 = scmp.ne.s32.totalorder %s33, %s36
    %p45 = scmp.eq.s32.totalorder %s14, 7
    %p46 = por %p44, %p45
    %p47 = scmp.ne.s32.totalorder %s36, %s37
    %p48 = scmp.eq.s32.totalorder %s14, 0
    %p49 = por %p47, %p48
    %p50 = scmp.ne.s32.totalorder %s36, %s37
    %p51 = scmp.eq.s32.totalorder %s15, 7
    %p52 = por %p50, %p51
    %p54 = scmp.ne.s32.totalorder %s37, %s53
    %p55 = scmp.eq.s32.totalorder %s15, 0
    %p56 = por %p54, %p55
    %s57 = ssub.s32 %s16, %s28
    %s58 = ssub.s32 %s17, %s24
    %s59 = sor.u32 %s57, %s58
    %p60 = scmp.eq.s32.totalorder %s59, 0
    %s62 = sadd.s32 %s61, 1
    %s63 = scalar_select %p60, %s61, %s62
    %p66 = pneg %p60
    %p67 = scmp.eq.s32.totalorder %s9, 7
    %p68 = por %p66, %p67
    %p69 = scmp.ne.s32.totalorder %s61, %s64
    %p70 = scmp.eq.s32.totalorder %s9, 0
    %p71 = por %p69, %p70
    %p72 = scmp.ne.s32.totalorder %s61, %s64
    %p73 = scmp.eq.s32.totalorder %s14, 7
    %p74 = por %p72, %p73
    %p75 = scmp.ne.s32.totalorder %s64, %s65
    %p76 = scmp.eq.s32.totalorder %s14, 0
    %p77 = por %p75, %p76
    %p78 = scmp.ne.s32.totalorder %s64, %s65
    %p79 = scmp.eq.s32.totalorder %s15, 7
    %p80 = por %p78, %p79
    %p82 = scmp.ne.s32.totalorder %s65, %s81
    %p83 = scmp.eq.s32.totalorder %s15, 0
    %p84 = por %p82, %p83
    %s85 = ssub.s32 %s16, %s28
    %s86 = ssub.s32 %s17, %s24
    %s87 = sor.u32 %s85, %s86
    %p88 = scmp.eq.s32.totalorder %s87, 0
    %s90 = sadd.s32 %s89, 1
    %s91 = scalar_select %p88, %s89, %s90
    %p94 = pneg %p88
    %p95 = scmp.eq.s32.totalorder %s9, 7
    %p96 = por %p94, %p95
    %p97 = scmp.ne.s32.totalorder %s89, %s92
    %p98 = scmp.eq.s32.totalorder %s9, 0
    %p99 = por %p97, %p98
    %p100 = scmp.ne.s32.totalorder %s89, %s92
    %p101 = scmp.eq.s32.totalorder %s14, 7
    %p102 = por %p100, %p101
    %p103 = scmp.ne.s32.totalorder %s92, %s93
    %p104 = scmp.eq.s32.totalorder %s14, 0
    %p105 = por %p103, %p104
    %p106 = scmp.ne.s32.totalorder %s92, %s93
    %p107 = scmp.eq.s32.totalorder %s15, 7
    %p108 = por %p106, %p107
    %p110 = scmp.ne.s32.totalorder %s93, %s109
    %p111 = scmp.eq.s32.totalorder %s15, 0
    %p112 = por %p110, %p111
    %s113 = ssub.s32 %s16, %s28
    %s114 = ssub.s32 %s17, %s24
    %s115 = sor.u32 %s113, %s114
    %p116 = scmp.eq.s32.totalorder %s115, 0
    %s118 = sadd.s32 %s117, 1
    %s119 = scalar_select %p116, %s117, %s118
    %p122 = pneg %p116
    %p123 = scmp.eq.s32.totalorder %s9, 7
    %p124 = por %p122, %p123
    %p125 = scmp.ne.s32.totalorder %s117, %s120
    %p126 = scmp.eq.s32.totalorder %s9, 0
    %p127 = por %p125, %p126
    %p128 = scmp.ne.s32.totalorder %s117, %s120
    %p129 = scmp.eq.s32.totalorder %s14, 7
    %p130 = por %p128, %p129
    %p131 = scmp.ne.s32.totalorder %s120, %s121
    %p132 = scmp.eq.s32.totalorder %s14, 0
    %p133 = por %p131, %p132
    %p134 = scmp.ne.s32.totalorder %s120, %s121
    %p135 = scmp.eq.s32.totalorder %s15, 7
    %p136 = por %p134, %p135
    %p138 = scmp.ne.s32.totalorder %s121, %s137
    %p139 = scmp.eq.s32.totalorder %s15, 0
    %p140 = por %p138, %p139
    %p141 = scmp.le.s32.totalorder 1, %s9
    %p142 = scmp.lt.s32.totalorder %s9, 9
    %p143 = pnand %p141, %p142
    %p144 = pneg %p143
    // Predicated region
    $region9: #{my_memory_attention.21} parent=5 // pred_check
      _
    $region10: #{my_memory_attention.21} parent=5 // pred_check_branch
      %146 = sbr.rel (%p143) target = $region12
    $region11: #{my_memory_attention.21} parent=5 // pred_region
      %s147 = ssub.s32 %s9, 1
    $region12: #{my_memory_attention.21} parent=5 // pred_fallthru
      _
    %p148 = scmp.lt.s32.totalorder %s9, 8
    // Predicated region
    $region13: #{my_memory_attention.21} parent=5 // pred_check
      %p149 = pneg %p148
    $region14: #{my_memory_attention.21} parent=5 // pred_check_branch
      %151 = sbr.rel (%p149) target = $region16
    $region15: #{my_memory_attention.21} parent=5 // pred_region
      // Predicated region
      $region17: #{my_memory_attention.21} parent=15 // pred_check
        %p152 = pneg %p43
      $region18: #{my_memory_attention.21} parent=15 // pred_check_branch
        %154 = sbr.rel (%p152) target = $region20
      $region19: #{my_memory_attention.21} parent=15 // pred_region
        %p155 = scmp.lt.s32.totalorder %s16, 1
        %s156 = scalar_select %p155, %s16, 1
        %p157 = scmp.lt.s32.totalorder %s17, 3
        %s158 = scalar_select %p157, %s17, 3
        %s159 = smul.addr %s156, 4
        %s160 = sadd.s32 %s158, %s159
        %s161 = smul.addr %s160, 8
        %s162 = scalar_lea.vmem %s0, %s161
      $region20: #{my_memory_attention.21} parent=15 // pred_fallthru
        _
      // Predicated region
      $region21: #{my_memory_attention.21} parent=15 // pred_check
        %p163 = pneg %p71
      $region22: #{my_memory_attention.21} parent=15 // pred_check_branch
        %165 = sbr.rel (%p163) target = $region24
      $region23: #{my_memory_attention.21} parent=15 // pred_region
        %p166 = scmp.lt.s32.totalorder %s16, 1
        %s167 = scalar_select %p166, %s16, 1
        %p168 = scmp.lt.s32.totalorder %s17, 3
        %s169 = scalar_select %p168, %s17, 3
        %s170 = smul.addr %s167, 4
        %s171 = sadd.s32 %s169, %s170
        %s172 = smul.addr %s171, 4
        %s173 = scalar_lea.vmem %s1, %s172
      $region24: #{my_memory_attention.21} parent=15 // pred_fallthru
        _
      // Predicated region
      $region25: #{my_memory_attention.21} parent=15 // pred_check
        %p174 = pneg %p99
      $region26: #{my_memory_attention.21} parent=15 // pred_check_branch
        %176 = sbr.rel (%p174) target = $region28
      $region27: #{my_memory_attention.21} parent=15 // pred_region
        %p177 = scmp.lt.s32.totalorder %s16, 1
        %s178 = scalar_select %p177, %s16, 1
        %p179 = scmp.lt.s32.totalorder %s17, 3
        %s180 = scalar_select %p179, %s17, 3
        %s181 = smul.addr %s178, 4
        %s182 = sadd.s32 %s180, %s181
        %s183 = smul.addr %s182, 4
        %s184 = scalar_lea.vmem %s2, %s183
      $region28: #{my_memory_attention.21} parent=15 // pred_fallthru
        _
    $region16: #{my_memory_attention.21} parent=5 // pred_fallthru
      _
    %p185 = scmp.le.s32.totalorder 1, %s9
    %p186 = scmp.lt.s32.totalorder %s9, 9
    %p187 = pnand %p185, %p186
    %p188 = pneg %p187
    // Predicated region
    $region29: #{my_memory_attention.21} parent=5 // pred_check
      _
    $region30: #{my_memory_attention.21} parent=5 // pred_check_branch
      %190 = sbr.rel (%p187) target = $region32
    $region31: #{my_memory_attention.21} parent=5 // pred_region
      %s191 = ssub.s32 %s9, 1
      %p192 = scmp.lt.s32.totalorder %s18, 1
      %s193 = scalar_select %p192, %s18, 1
      %p194 = scmp.lt.s32.totalorder %s19, 3
      %s195 = scalar_select %p194, %s19, 3
      %s196 = smul.addr %s193, 4
      %s197 = sadd.s32 %s195, %s196
      %s198 = smul.addr %s197, 8
      %s199 = scalar_lea.vmem %s0, %s198
      %p200 = pneg %p49
      %p201 = pneg %p46
      %p202 = scmp.lt.s32.totalorder %s18, 1
      %s203 = scalar_select %p202, %s18, 1
      %p204 = scmp.lt.s32.totalorder %s19, 3
      %s205 = scalar_select %p204, %s19, 3
      %s206 = smul.addr %s203, 4
      %s207 = sadd.s32 %s205, %s206
      %s208 = smul.addr %s207, 4
      %s209 = scalar_lea.vmem %s1, %s208
      %p210 = pneg %p77
      %p211 = pneg %p74
      %p212 = scmp.lt.s32.totalorder %s18, 1
      %s213 = scalar_select %p212, %s18, 1
      %p214 = scmp.lt.s32.totalorder %s19, 3
      %s215 = scalar_select %p214, %s19, 3
      %s216 = smul.addr %s213, 4
      %s217 = sadd.s32 %s215, %s216
      %s218 = smul.addr %s217, 4
      %s219 = scalar_lea.vmem %s2, %s218
      %p220 = pneg %p105
      %p221 = pneg %p102
      %p222 = pneg %p133
      %p223 = pneg %p130
      %p224 = scmp.lt.s32.totalorder %s18, 1
      %s225 = scalar_select %p224, %s18, 1
      %p226 = scmp.lt.s32.totalorder %s19, 3
      %s227 = scalar_select %p226, %s19, 3
      %s228 = smul.addr %s225, 4
      %s229 = sadd.s32 %s227, %s228
      %s230 = smul.addr %s229, 8
      %s231 = scalar_lea.vmem %s3, %s230
      %p232 = scmp.lt.s32.totalorder %s18, 1
      %s233 = scalar_select %p232, %s18, 1
      %p234 = scmp.lt.s32.totalorder %s19, 3
      %s235 = scalar_select %p234, %s19, 3
      %s236 = smul.addr %s233, 4
      %s237 = sadd.s32 %s235, %s236
      %s238 = smul.addr %s237, 8
      %s239 = scalar_lea.vmem %s0, %s238
      %p240 = scmp.lt.s32.totalorder %s18, 1
      %s241 = scalar_select %p240, %s18, 1
      %p242 = scmp.lt.s32.totalorder %s19, 3
      %s243 = scalar_select %p242, %s19, 3
      %s244 = smul.addr %s241, 4
      %s245 = sadd.s32 %s243, %s244
      %s246 = smul.addr %s245, 4
      %s247 = scalar_lea.vmem %s1, %s246
      %p248 = scmp.lt.s32.totalorder %s18, 1
      %s249 = scalar_select %p248, %s18, 1
      %p250 = scmp.lt.s32.totalorder %s19, 3
      %s251 = scalar_select %p250, %s19, 3
      %s252 = smul.addr %s249, 4
      %s253 = sadd.s32 %s251, %s252
      %s254 = smul.addr %s253, 4
      %s255 = scalar_lea.vmem %s2, %s254
      %p256 = scmp.lt.s32.totalorder %s18, 1
      %s257 = scalar_select %p256, %s18, 1
      %p258 = scmp.lt.s32.totalorder %s19, 3
      %s259 = scalar_select %p258, %s19, 3
      %s260 = smul.addr %s257, 4
      %s261 = sadd.s32 %s259, %s260
      %s262 = smul.addr %s261, 8
      %s263 = scalar_lea.vmem %s3, %s262
      %v265 = vld [vmem:[%s239] sm:$0xff]
      %v266 = vpack.c.bf16 %v265, %v265
      %v267 = vld [vmem:[%s247] sm:$0xf]
      %v268 = vpack.c.bf16 %v267, %v267
      %vm269 = vcmask 64512
      %v271 = vsel %vm269, %v266, 0
      %v274 = vsel %vm269, %v268, 0
      %276 = vmatprep.subr.bf16.mxu0 0
      %277 = vmatpush1.bf16.xpose.msra.mxu0 0
      %278 = vmatprep.subr.bf16.mxu0 0
      %279 = vmatpush1.bf16.xpose.msra.mxu0 0
      %280 = vmatprep.subr.bf16.mxu0 0
      %281 = vmatpush1.bf16.xpose.msra.mxu0 0
      %282 = vmatprep.subr.bf16.mxu0 0
      %283 = vmatpush1.bf16.xpose.msra.mxu0 0
      %284 = vmatprep.subr.bf16.mxu0 0
      %285 = vmatpush1.bf16.xpose.msra.mxu0 0
      %286 = vmatprep.subr.bf16.mxu0 0
      %287 = vmatpush1.bf16.xpose.msra.mxu0 0
      %288 = vmatprep.subr.bf16.mxu0 0
      %289 = vmatpush1.bf16.xpose.msra.mxu0 0
      %290 = vmatprep.subr.bf16.mxu0 0
      %291 = vmatpush1.bf16.xpose.msra.mxu0 %v274
      %292 = vmatprep.subr.bf16.mxu0 0
      %293 = vmatpush2.bf16.xpose.msra.mxu0 0
      %294 = vmatprep.subr.bf16.mxu0 0
      %295 = vmatpush2.bf16.xpose.msra.mxu0 0
      %296 = vmatprep.subr.bf16.mxu0 0
      %297 = vmatpush2.bf16.xpose.msra.mxu0 0
      %298 = vmatprep.subr.bf16.mxu0 0
      %299 = vmatpush2.bf16.xpose.msra.mxu0 0
      %300 = vmatprep.subr.bf16.mxu0 0
      %301 = vmatpush2.bf16.xpose.msra.mxu0 0
      %302 = vmatprep.subr.bf16.mxu0 0
      %303 = vmatpush2.bf16.xpose.msra.mxu0 0
      %304 = vmatprep.subr.bf16.mxu0 0
      %305 = vmatpush2.bf16.xpose.msra.mxu0 0
      %306 = vmatprep.subr.bf16.mxu0 0
      %307 = vmatpush2.bf16.xpose.msra.mxu0 0
      %308 = vmatprep.mubr.bf16.mxu0 0
      %309 = vmatmul.mubr.bf16.gmra.mxu0 %v271
      %v310 = vpop.f32.mrf.mxu0
      %v311 = vadd.f32 0.0, %v310
      %v312 = vpop.f32.mrf.mxu0
      %v313 = vpop.f32.mrf.mxu0
      %v314 = vpop.f32.mrf.mxu0
      %315 = vdwg.mxu0
      %v316 = vmul.f32 %v311, 0.35355338
      %vm317 = vcmask 31744
      %v318 = vsel %vm317, %v316, -inf
      %319 = vmax.xlane.f32.xlu0 %v318
      %v320 = vpop.xlane.xlu0 %319
      %v321 = vsub.f32 %v316, %v320
      %v322 = vmul.f32 %v321, 1.442695
      %v323 = vpow.pop %v322
      %v324 = vsel %vm317, %v323, 0.0
      %325 = vadd.xlane.f32.xlu0 %v324
      %v326 = vpop.xlane.xlu0 %325
      %v327 = vrcp.pop %v326
      %v328 = vmul.f32 %v323, %v327
      %v329 = vpack.c.bf16 %v328, %v328
      %v330 = vld [vmem:[%s255] sm:$0xf]
      %v331 = vpack.c.bf16 %v330, %v330
      %v333 = vsel %vm317, %v329, 0
      %vm335 = vcmask 1041408
      %v337 = vsel %vm335, %v331, 0
      %339 = vmatprep.subr.bf16.mxu0 0
      %340 = vmatpush1.bf16.msra.mxu0 0
      %341 = vmatprep.subr.bf16.mxu0 0
      %342 = vmatpush1.bf16.msra.mxu0 0
      %343 = vmatprep.subr.bf16.mxu0 0
      %344 = vmatpush1.bf16.msra.mxu0 0
      %345 = vmatprep.subr.bf16.mxu0 0
      %346 = vmatpush1.bf16.msra.mxu0 0
      %347 = vmatprep.subr.bf16.mxu0 0
      %348 = vmatpush1.bf16.msra.mxu0 0
      %349 = vmatprep.subr.bf16.mxu0 0
      %350 = vmatpush1.bf16.msra.mxu0 0
      %351 = vmatprep.subr.bf16.mxu0 0
      %352 = vmatpush1.bf16.msra.mxu0 0
      %353 = vmatprep.subr.bf16.mxu0 0
      %354 = vmatpush1.bf16.msra.mxu0 %v337
      %355 = vmatprep.subr.bf16.mxu0 0
      %356 = vmatpush2.bf16.msra.mxu0 0
      %357 = vmatprep.subr.bf16.mxu0 0
      %358 = vmatpush2.bf16.msra.mxu0 0
      %359 = vmatprep.subr.bf16.mxu0 0
      %360 = vmatpush2.bf16.msra.mxu0 0
      %361 = vmatprep.subr.bf16.mxu0 0
      %362 = vmatpush2.bf16.msra.mxu0 0
      %363 = vmatprep.subr.bf16.mxu0 0
      %364 = vmatpush2.bf16.msra.mxu0 0
      %365 = vmatprep.subr.bf16.mxu0 0
      %366 = vmatpush2.bf16.msra.mxu0 0
      %367 = vmatprep.subr.bf16.mxu0 0
      %368 = vmatpush2.bf16.msra.mxu0 0
      %369 = vmatprep.subr.bf16.mxu0 0
      %370 = vmatpush2.bf16.msra.mxu0 0
      %371 = vmatprep.mubr.bf16.mxu0 0
      %372 = vmatmul.mubr.bf16.gmra.mxu0 %v333
      %v373 = vpop.f32.mrf.mxu0
      %v374 = vadd.f32 0.0, %v373
      %v375 = vpop.f32.mrf.mxu0
      %v376 = vpop.f32.mrf.mxu0
      %v377 = vpop.f32.mrf.mxu0
      %378 = vdwg.mxu0
      %379 = vst.msk [vmem:[%s263] sm:$0xff] %vm269, %v374
      %p380 = scmp.lt.s32.totalorder %s18, 1
      %s381 = scalar_select %p380, %s18, 1
      %p382 = scmp.lt.s32.totalorder %s19, 3
      %s383 = scalar_select %p382, %s19, 3
      %s384 = smul.addr %s381, 4
      %s385 = sadd.s32 %s383, %s384
      %s386 = smul.addr %s385, 8
      %s387 = scalar_lea.vmem %s3, %s386
      // Predicated region
      $region33: #{my_memory_attention.21} parent=31 // pred_check
        %p388 = pneg %p130
      $region34: #{my_memory_attention.21} parent=31 // pred_check_branch
        %390 = sbr.rel (%p388) target = $region36
      $region35: #{my_memory_attention.21} parent=31 // pred_region
        _
      $region36: #{my_memory_attention.21} parent=31 // pred_fallthru
        _
    $region32: #{my_memory_attention.21} parent=5 // pred_fallthru
      _
    %p391 = scmp.le.s32.totalorder 2, %s9
    // Predicated region
    $region37: #{my_memory_attention.21} parent=5 // pred_check
      %p392 = pneg %p391
    $region38: #{my_memory_attention.21} parent=5 // pred_check_branch
      %394 = sbr.rel (%p392) target = $region40
    $region39: #{my_memory_attention.21} parent=5 // pred_region
      %s395 = ssub.s32 %s9, 2
      // Predicated region
      $region41: #{my_memory_attention.21} parent=39 // pred_check
        %p396 = pneg %p136
      $region42: #{my_memory_attention.21} parent=39 // pred_check_branch
        %398 = sbr.rel (%p396) target = $region44
      $region43: #{my_memory_attention.21} parent=39 // pred_region
        %p399 = scmp.lt.s32.totalorder %s20, 1
        %s400 = scalar_select %p399, %s20, 1
        %p401 = scmp.lt.s32.totalorder %s21, 3
        %s402 = scalar_select %p401, %s21, 3
        %s403 = smul.addr %s400, 4
        %s404 = sadd.s32 %s402, %s403
        %s405 = smul.addr %s404, 8
        %s406 = scalar_lea.vmem %s3, %s405
      $region44: #{my_memory_attention.21} parent=39 // pred_fallthru
        _
    $region40: #{my_memory_attention.21} parent=5 // pred_fallthru
      _
  $region6: #{my_memory_attention.21} parent=0 // loop_footer
    %s13 = sadd.s32 1, %s9
  $region7: #{my_memory_attention.21} parent=0 // loop_footer_branch
    %8 = sbr.rel target = $region3
  $region8: #{my_memory_attention.21} parent=0 // loop_exit
    _

// kernel: my_memory_attention.20
$region0: #{my_memory_attention.20}
  #allocation0 [shape = 'u32[]', space=smem, size = 0x4, offset = 0x4, fixed_abs, tag = 'smem constant byte address 0x4 - core index']
  #allocation1 [shape = 'u32[144,128]{1,0:T(1,128)}', space=vmem, size = 0x12000, scoped, tag = 'internal scratch']
  %s0 = inlined_call_operand.vmem [shape: f32[2,4,8,8], index: 0, kind: input, shape index: {}]
  %s1 = inlined_call_operand.vmem [shape: f32[2,4,8,8], index: 1, kind: input, shape index: {}]
  %s2 = inlined_call_operand.vmem [shape: f32[2,4,8,8], index: 2, kind: input, shape index: {}]
  %s3 = inlined_call_operand.vmem [shape: f32[2,4,8,8], index: 3, kind: output, shape index: {}]
  %s4 = sld [smem:[#allocation0]]
  $region45: #{my_memory_attention.20} parent=0
    _
  %s6 = ssub.s32 1, %s4
  %s7 = scalar_select 0, %s6, %s4
  loop: start=0, step=1, limit=10
  $region2: #{my_memory_attention.20} parent=0 // loop_pre_header
    _
  $region3: #{my_memory_attention.20} parent=0 // loop_header
    %s9 = sphi 0, %s13
    %p10 = scmp.ge.s32.totalorder %s9, 10
    %s16 = sphi 0, %s28
    %s17 = sphi 0, %s24
    %s18 = sphi 0, %s16
    %s19 = sphi 0, %s17
    %s20 = sphi 0, %s18
    %s21 = sphi 0, %s19
    %s33 = sphi 0, %s35
    %s36 = sphi 0, %s33
    %s37 = sphi 0, %s36
    %s53 = sphi 0, %s37
    %s61 = sphi 0, %s63
    %s64 = sphi 0, %s61
    %s65 = sphi 0, %s64
    %s81 = sphi 0, %s65
    %s89 = sphi 0, %s91
    %s92 = sphi 0, %s89
    %s93 = sphi 0, %s92
    %s109 = sphi 0, %s93
    %s117 = sphi 0, %s119
    %s120 = sphi 0, %s117
    %s121 = sphi 0, %s120
    %s137 = sphi 0, %s121
  $region4: #{my_memory_attention.20} parent=0 // loop_header_branch
    %12 = sbr.rel (%p10) target = $region8
  $region5: #{my_memory_attention.20} parent=0 // loop_body
    %s14 = ssub.s32 %s9, 1
    %s15 = ssub.s32 %s9, 2
    %s22 = sadd.s32 1, %s17
    %p23 = scmp.ge.s32.totalorder %s22, 4
    %s24 = scalar_select %p23, 0, %s22
    %s25 = sadd.s32 1, %s16
    %s26 = scalar_select %p23, %s25, %s16
    %p27 = scmp.ge.s32.totalorder %s26, 2
    %s28 = scalar_select %p27, 0, %s26
    %s29 = ssub.s32 %s16, %s28
    %s30 = ssub.s32 %s17, %s24
    %s31 = sor.u32 %s29, %s30
    %p32 = scmp.eq.s32.totalorder %s31, 0
    %s34 = sadd.s32 %s33, 1
    %s35 = scalar_select %p32, %s33, %s34
    %p38 = pneg %p32
    %p39 = scmp.eq.s32.totalorder %s9, 7
    %p40 = por %p38, %p39
    %p41 = scmp.ne.s32.totalorder %s33, %s36
    %p42 = scmp.eq.s32.totalorder %s9, 0
    %p43 = por %p41, %p42
    %p44 = scmp.ne.s32.totalorder %s33, %s36
    %p45 = scmp.eq.s32.totalorder %s14, 7
    %p46 = por %p44, %p45
    %p47 = scmp.ne.s32.totalorder %s36, %s37
    %p48 = scmp.eq.s32.totalorder %s14, 0
    %p49 = por %p47, %p48
    %p50 = scmp.ne.s32.totalorder %s36, %s37
    %p51 = scmp.eq.s32.totalorder %s15, 7
    %p52 = por %p50, %p51
    %p54 = scmp.ne.s32.totalorder %s37, %s53
    %p55 = scmp.eq.s32.totalorder %s15, 0
    %p56 = por %p54, %p55
    %s57 = ssub.s32 %s16, %s28
    %s58 = ssub.s32 %s17, %s24
    %s59 = sor.u32 %s57, %s58
    %p60 = scmp.eq.s32.totalorder %s59, 0
    %s62 = sadd.s32 %s61, 1
    %s63 = scalar_select %p60, %s61, %s62
    %p66 = pneg %p60
    %p67 = scmp.eq.s32.totalorder %s9, 7
    %p68 = por %p66, %p67
    %p69 = scmp.ne.s32.totalorder %s61, %s64
    %p70 = scmp.eq.s32.totalorder %s9, 0
    %p71 = por %p69, %p70
    %p72 = scmp.ne.s32.totalorder %s61, %s64
    %p73 = scmp.eq.s32.totalorder %s14, 7
    %p74 = por %p72, %p73
    %p75 = scmp.ne.s32.totalorder %s64, %s65
    %p76 = scmp.eq.s32.totalorder %s14, 0
    %p77 = por %p75, %p76
    %p78 = scmp.ne.s32.totalorder %s64, %s65
    %p79 = scmp.eq.s32.totalorder %s15, 7
    %p80 = por %p78, %p79
    %p82 = scmp.ne.s32.totalorder %s65, %s81
    %p83 = scmp.eq.s32.totalorder %s15, 0
    %p84 = por %p82, %p83
    %s85 = ssub.s32 %s16, %s28
    %s86 = ssub.s32 %s17, %s24
    %s87 = sor.u32 %s85, %s86
    %p88 = scmp.eq.s32.totalorder %s87, 0
    %s90 = sadd.s32 %s89, 1
    %s91 = scalar_select %p88, %s89, %s90
    %p94 = pneg %p88
    %p95 = scmp.eq.s32.totalorder %s9, 7
    %p96 = por %p94, %p95
    %p97 = scmp.ne.s32.totalorder %s89, %s92
    %p98 = scmp.eq.s32.totalorder %s9, 0
    %p99 = por %p97, %p98
    %p100 = scmp.ne.s32.totalorder %s89, %s92
    %p101 = scmp.eq.s32.totalorder %s14, 7
    %p102 = por %p100, %p101
    %p103 = scmp.ne.s32.totalorder %s92, %s93
    %p104 = scmp.eq.s32.totalorder %s14, 0
    %p105 = por %p103, %p104
    %p106 = scmp.ne.s32.totalorder %s92, %s93
    %p107 = scmp.eq.s32.totalorder %s15, 7
    %p108 = por %p106, %p107
    %p110 = scmp.ne.s32.totalorder %s93, %s109
    %p111 = scmp.eq.s32.totalorder %s15, 0
    %p112 = por %p110, %p111
    %s113 = ssub.s32 %s16, %s28
    %s114 = ssub.s32 %s17, %s24
    %s115 = sor.u32 %s113, %s114
    %p116 = scmp.eq.s32.totalorder %s115, 0
    %s118 = sadd.s32 %s117, 1
    %s119 = scalar_select %p116, %s117, %s118
    %p122 = pneg %p116
    %p123 = scmp.eq.s32.totalorder %s9, 7
    %p124 = por %p122, %p123
    %p125 = scmp.ne.s32.totalorder %s117, %s120
    %p126 = scmp.eq.s32.totalorder %s9, 0
    %p127 = por %p125, %p126
    %p128 = scmp.ne.s32.totalorder %s117, %s120
    %p129 = scmp.eq.s32.totalorder %s14, 7
    %p130 = por %p128, %p129
    %p131 = scmp.ne.s32.totalorder %s120, %s121
    %p132 = scmp.eq.s32.totalorder %s14, 0
    %p133 = por %p131, %p132
    %p134 = scmp.ne.s32.totalorder %s120, %s121
    %p135 = scmp.eq.s32.totalorder %s15, 7
    %p136 = por %p134, %p135
    %p138 = scmp.ne.s32.totalorder %s121, %s137
    %p139 = scmp.eq.s32.totalorder %s15, 0
    %p140 = por %p138, %p139
    %p141 = scmp.le.s32.totalorder 1, %s9
    %p142 = scmp.lt.s32.totalorder %s9, 9
    %p143 = pnand %p141, %p142
    %p144 = pneg %p143
    // Predicated region
    $region9: #{my_memory_attention.20} parent=5 // pred_check
      _
    $region10: #{my_memory_attention.20} parent=5 // pred_check_branch
      %146 = sbr.rel (%p143) target = $region12
    $region11: #{my_memory_attention.20} parent=5 // pred_region
      %s147 = ssub.s32 %s9, 1
    $region12: #{my_memory_attention.20} parent=5 // pred_fallthru
      _
    %p148 = scmp.lt.s32.totalorder %s9, 8
    // Predicated region
    $region13: #{my_memory_attention.20} parent=5 // pred_check
      %p149 = pneg %p148
    $region14: #{my_memory_attention.20} parent=5 // pred_check_branch
      %151 = sbr.rel (%p149) target = $region16
    $region15: #{my_memory_attention.20} parent=5 // pred_region
      // Predicated region
      $region17: #{my_memory_attention.20} parent=15 // pred_check
        %p152 = pneg %p43
      $region18: #{my_memory_attention.20} parent=15 // pred_check_branch
        %154 = sbr.rel (%p152) target = $region20
      $region19: #{my_memory_attention.20} parent=15 // pred_region
        %p155 = scmp.lt.s32.totalorder %s16, 1
        %s156 = scalar_select %p155, %s16, 1
        %p157 = scmp.lt.s32.totalorder %s17, 3
        %s158 = scalar_select %p157, %s17, 3
        %s159 = smul.addr %s156, 4
        %s160 = sadd.s32 %s158, %s159
        %s161 = smul.addr %s160, 8
        %s162 = scalar_lea.vmem %s0, %s161
      $region20: #{my_memory_attention.20} parent=15 // pred_fallthru
        _
      // Predicated region
      $region21: #{my_memory_attention.20} parent=15 // pred_check
        %p163 = pneg %p71
      $region22: #{my_memory_attention.20} parent=15 // pred_check_branch
        %165 = sbr.rel (%p163) target = $region24
      $region23: #{my_memory_attention.20} parent=15 // pred_region
        %p166 = scmp.lt.s32.totalorder %s16, 1
        %s167 = scalar_select %p166, %s16, 1
        %p168 = scmp.lt.s32.totalorder %s17, 3
        %s169 = scalar_select %p168, %s17, 3
        %s170 = smul.addr %s167, 4
        %s171 = sadd.s32 %s169, %s170
        %s172 = smul.addr %s171, 8
        %s173 = scalar_lea.vmem %s1, %s172
      $region24: #{my_memory_attention.20} parent=15 // pred_fallthru
        _
      // Predicated region
      $region25: #{my_memory_attention.20} parent=15 // pred_check
        %p174 = pneg %p99
      $region26: #{my_memory_attention.20} parent=15 // pred_check_branch
        %176 = sbr.rel (%p174) target = $region28
      $region27: #{my_memory_attention.20} parent=15 // pred_region
        %p177 = scmp.lt.s32.totalorder %s16, 1
        %s178 = scalar_select %p177, %s16, 1
        %p179 = scmp.lt.s32.totalorder %s17, 3
        %s180 = scalar_select %p179, %s17, 3
        %s181 = smul.addr %s178, 4
        %s182 = sadd.s32 %s180, %s181
        %s183 = smul.addr %s182, 8
        %s184 = scalar_lea.vmem %s2, %s183
      $region28: #{my_memory_attention.20} parent=15 // pred_fallthru
        _
    $region16: #{my_memory_attention.20} parent=5 // pred_fallthru
      _
    %p185 = scmp.le.s32.totalorder 1, %s9
    %p186 = scmp.lt.s32.totalorder %s9, 9
    %p187 = pnand %p185, %p186
    %p188 = pneg %p187
    // Predicated region
    $region29: #{my_memory_attention.20} parent=5 // pred_check
      _
    $region30: #{my_memory_attention.20} parent=5 // pred_check_branch
      %190 = sbr.rel (%p187) target = $region32
    $region31: #{my_memory_attention.20} parent=5 // pred_region
      %s191 = ssub.s32 %s9, 1
      %p192 = scmp.lt.s32.totalorder %s18, 1
      %s193 = scalar_select %p192, %s18, 1
      %p194 = scmp.lt.s32.totalorder %s19, 3
      %s195 = scalar_select %p194, %s19, 3
      %s196 = smul.addr %s193, 4
      %s197 = sadd.s32 %s195, %s196
      %s198 = smul.addr %s197, 8
      %s199 = scalar_lea.vmem %s0, %s198
      %p200 = pneg %p49
      %p201 = pneg %p46
      %p202 = scmp.lt.s32.totalorder %s18, 1
      %s203 = scalar_select %p202, %s18, 1
      %p204 = scmp.lt.s32.totalorder %s19, 3
      %s205 = scalar_select %p204, %s19, 3
      %s206 = smul.addr %s203, 4
      %s207 = sadd.s32 %s205, %s206
      %s208 = smul.addr %s207, 8
      %s209 = scalar_lea.vmem %s1, %s208
      %p210 = pneg %p77
      %p211 = pneg %p74
      %p212 = scmp.lt.s32.totalorder %s18, 1
      %s213 = scalar_select %p212, %s18, 1
      %p214 = scmp.lt.s32.totalorder %s19, 3
      %s215 = scalar_select %p214, %s19, 3
      %s216 = smul.addr %s213, 4
      %s217 = sadd.s32 %s215, %s216
      %s218 = smul.addr %s217, 8
      %s219 = scalar_lea.vmem %s2, %s218
      %p220 = pneg %p105
      %p221 = pneg %p102
      %p222 = pneg %p133
      %p223 = pneg %p130
      %p224 = scmp.lt.s32.totalorder %s18, 1
      %s225 = scalar_select %p224, %s18, 1
      %p226 = scmp.lt.s32.totalorder %s19, 3
      %s227 = scalar_select %p226, %s19, 3
      %s228 = smul.addr %s225, 4
      %s229 = sadd.s32 %s227, %s228
      %s230 = smul.addr %s229, 8
      %s231 = scalar_lea.vmem %s3, %s230
      %p232 = scmp.lt.s32.totalorder %s18, 1
      %s233 = scalar_select %p232, %s18, 1
      %p234 = scmp.lt.s32.totalorder %s19, 3
      %s235 = scalar_select %p234, %s19, 3
      %s236 = smul.addr %s233, 4
      %s237 = sadd.s32 %s235, %s236
      %s238 = smul.addr %s237, 8
      %s239 = scalar_lea.vmem %s0, %s238
      %p240 = scmp.lt.s32.totalorder %s18, 1
      %s241 = scalar_select %p240, %s18, 1
      %p242 = scmp.lt.s32.totalorder %s19, 3
      %s243 = scalar_select %p242, %s19, 3
      %s244 = smul.addr %s241, 4
      %s245 = sadd.s32 %s243, %s244
      %s246 = smul.addr %s245, 8
      %s247 = scalar_lea.vmem %s1, %s246
      %p248 = scmp.lt.s32.totalorder %s18, 1
      %s249 = scalar_select %p248, %s18, 1
      %p250 = scmp.lt.s32.totalorder %s19, 3
      %s251 = scalar_select %p250, %s19, 3
      %s252 = smul.addr %s249, 4
      %s253 = sadd.s32 %s251, %s252
      %s254 = smul.addr %s253, 8
      %s255 = scalar_lea.vmem %s2, %s254
      %p256 = scmp.lt.s32.totalorder %s18, 1
      %s257 = scalar_select %p256, %s18, 1
      %p258 = scmp.lt.s32.totalorder %s19, 3
      %s259 = scalar_select %p258, %s19, 3
      %s260 = smul.addr %s257, 4
      %s261 = sadd.s32 %s259, %s260
      %s262 = smul.addr %s261, 8
      %s263 = scalar_lea.vmem %s3, %s262
      %v265 = vld [vmem:[%s239] sm:$0xff]
      %v266 = vpack.c.bf16 %v265, %v265
      %v267 = vld [vmem:[%s247] sm:$0xff]
      %v268 = vpack.c.bf16 %v267, %v267
      %vm269 = vcmask 64512
      %v271 = vsel %vm269, %v266, 0
      %v274 = vsel %vm269, %v268, 0
      %276 = vmatprep.subr.bf16.mxu0 0
      %277 = vmatpush1.bf16.xpose.msra.mxu0 0
      %278 = vmatprep.subr.bf16.mxu0 0
      %279 = vmatpush1.bf16.xpose.msra.mxu0 0
      %280 = vmatprep.subr.bf16.mxu0 0
      %281 = vmatpush1.bf16.xpose.msra.mxu0 0
      %282 = vmatprep.subr.bf16.mxu0 0
      %283 = vmatpush1.bf16.xpose.msra.mxu0 0
      %284 = vmatprep.subr.bf16.mxu0 0
      %285 = vmatpush1.bf16.xpose.msra.mxu0 0
      %286 = vmatprep.subr.bf16.mxu0 0
      %287 = vmatpush1.bf16.xpose.msra.mxu0 0
      %288 = vmatprep.subr.bf16.mxu0 0
      %289 = vmatpush1.bf16.xpose.msra.mxu0 0
      %290 = vmatprep.subr.bf16.mxu0 0
      %291 = vmatpush1.bf16.xpose.msra.mxu0 %v274
      %292 = vmatprep.subr.bf16.mxu0 0
      %293 = vmatpush2.bf16.xpose.msra.mxu0 0
      %294 = vmatprep.subr.bf16.mxu0 0
      %295 = vmatpush2.bf16.xpose.msra.mxu0 0
      %296 = vmatprep.subr.bf16.mxu0 0
      %297 = vmatpush2.bf16.xpose.msra.mxu0 0
      %298 = vmatprep.subr.bf16.mxu0 0
      %299 = vmatpush2.bf16.xpose.msra.mxu0 0
      %300 = vmatprep.subr.bf16.mxu0 0
      %301 = vmatpush2.bf16.xpose.msra.mxu0 0
      %302 = vmatprep.subr.bf16.mxu0 0
      %303 = vmatpush2.bf16.xpose.msra.mxu0 0
      %304 = vmatprep.subr.bf16.mxu0 0
      %305 = vmatpush2.bf16.xpose.msra.mxu0 0
      %306 = vmatprep.subr.bf16.mxu0 0
      %307 = vmatpush2.bf16.xpose.msra.mxu0 0
      %308 = vmatprep.mubr.bf16.mxu0 0
      %309 = vmatmul.mubr.bf16.gmra.mxu0 %v271
      %v310 = vpop.f32.mrf.mxu0
      %v311 = vadd.f32 0.0, %v310
      %v312 = vpop.f32.mrf.mxu0
      %v313 = vpop.f32.mrf.mxu0
      %v314 = vpop.f32.mrf.mxu0
      %315 = vdwg.mxu0
      %v316 = vmul.f32 %v311, 0.35355338
      %v317 = vsel %vm269, %v316, -inf
      %318 = vmax.xlane.f32.xlu0 %v317
      %v319 = vpop.xlane.xlu0 %318
      %v320 = vsub.f32 %v316, %v319
      %v321 = vmul.f32 %v320, 1.442695
      %v322 = vpow.pop %v321
      %v323 = vsel %vm269, %v322, 0.0
      %324 = vadd.xlane.f32.xlu0 %v323
      %v325 = vpop.xlane.xlu0 %324
      %v326 = vrcp.pop %v325
      %v327 = vmul.f32 %v322, %v326
      %v328 = vpack.c.bf16 %v327, %v327
      %v329 = vld [vmem:[%s255] sm:$0xff]
      %v330 = vpack.c.bf16 %v329, %v329
      %v332 = vsel %vm269, %v328, 0
      %vm334 = vcmask 1043456
      %v336 = vsel %vm334, %v330, 0
      %338 = vmatprep.subr.bf16.mxu0 0
      %339 = vmatpush1.bf16.msra.mxu0 0
      %340 = vmatprep.subr.bf16.mxu0 0
      %341 = vmatpush1.bf16.msra.mxu0 0
      %342 = vmatprep.subr.bf16.mxu0 0
      %343 = vmatpush1.bf16.msra.mxu0 0
      %344 = vmatprep.subr.bf16.mxu0 0
      %345 = vmatpush1.bf16.msra.mxu0 0
      %346 = vmatprep.subr.bf16.mxu0 0
      %347 = vmatpush1.bf16.msra.mxu0 0
      %348 = vmatprep.subr.bf16.mxu0 0
      %349 = vmatpush1.bf16.msra.mxu0 0
      %350 = vmatprep.subr.bf16.mxu0 0
      %351 = vmatpush1.bf16.msra.mxu0 0
      %352 = vmatprep.subr.bf16.mxu0 0
      %353 = vmatpush1.bf16.msra.mxu0 %v336
      %354 = vmatprep.subr.bf16.mxu0 0
      %355 = vmatpush2.bf16.msra.mxu0 0
      %356 = vmatprep.subr.bf16.mxu0 0
      %357 = vmatpush2.bf16.msra.mxu0 0
      %358 = vmatprep.subr.bf16.mxu0 0
      %359 = vmatpush2.bf16.msra.mxu0 0
      %360 = vmatprep.subr.bf16.mxu0 0
      %361 = vmatpush2.bf16.msra.mxu0 0
      %362 = vmatprep.subr.bf16.mxu0 0
      %363 = vmatpush2.bf16.msra.mxu0 0
      %364 = vmatprep.subr.bf16.mxu0 0
      %365 = vmatpush2.bf16.msra.mxu0 0
      %366 = vmatprep.subr.bf16.mxu0 0
      %367 = vmatpush2.bf16.msra.mxu0 0
      %368 = vmatprep.subr.bf16.mxu0 0
      %369 = vmatpush2.bf16.msra.mxu0 0
      %370 = vmatprep.mubr.bf16.mxu0 0
      %371 = vmatmul.mubr.bf16.gmra.mxu0 %v332
      %v372 = vpop.f32.mrf.mxu0
      %v373 = vadd.f32 0.0, %v372
      %v374 = vpop.f32.mrf.mxu0
      %v375 = vpop.f32.mrf.mxu0
      %v376 = vpop.f32.mrf.mxu0
      %377 = vdwg.mxu0
      %378 = vst.msk [vmem:[%s263] sm:$0xff] %vm269, %v373
      %p379 = scmp.lt.s32.totalorder %s18, 1
      %s380 = scalar_select %p379, %s18, 1
      %p381 = scmp.lt.s32.totalorder %s19, 3
      %s382 = scalar_select %p381, %s19, 3
      %s383 = smul.addr %s380, 4
      %s384 = sadd.s32 %s382, %s383
      %s385 = smul.addr %s384, 8
      %s386 = scalar_lea.vmem %s3, %s385
      // Predicated region
      $region33: #{my_memory_attention.20} parent=31 // pred_check
        %p387 = pneg %p130
      $region34: #{my_memory_attention.20} parent=31 // pred_check_branch
        %389 = sbr.rel (%p387) target = $region36
      $region35: #{my_memory_attention.20} parent=31 // pred_region
        _
      $region36: #{my_memory_attention.20} parent=31 // pred_fallthru
        _
    $region32: #{my_memory_attention.20} parent=5 // pred_fallthru
      _
    %p390 = scmp.le.s32.totalorder 2, %s9
    // Predicated region
    $region37: #{my_memory_attention.20} parent=5 // pred_check
      %p391 = pneg %p390
    $region38: #{my_memory_attention.20} parent=5 // pred_check_branch
      %393 = sbr.rel (%p391) target = $region40
    $region39: #{my_memory_attention.20} parent=5 // pred_region
      %s394 = ssub.s32 %s9, 2
      // Predicated region
      $region41: #{my_memory_attention.20} parent=39 // pred_check
        %p395 = pneg %p136
      $region42: #{my_memory_attention.20} parent=39 // pred_check_branch
        %397 = sbr.rel (%p395) target = $region44
      $region43: #{my_memory_attention.20} parent=39 // pred_region
        %p398 = scmp.lt.s32.totalorder %s20, 1
        %s399 = scalar_select %p398, %s20, 1
        %p400 = scmp.lt.s32.totalorder %s21, 3
        %s401 = scalar_select %p400, %s21, 3
        %s402 = smul.addr %s399, 4
        %s403 = sadd.s32 %s401, %s402
        %s404 = smul.addr %s403, 8
        %s405 = scalar_lea.vmem %s3, %s404
      $region44: #{my_memory_attention.20} parent=39 // pred_fallthru
        _
    $region40: #{my_memory_attention.20} parent=5 // pred_fallthru
      _
  $region6: #{my_memory_attention.20} parent=0 // loop_footer
    %s13 = sadd.s32 1, %s9
  $region7: #{my_memory_attention.20} parent=0 // loop_footer_branch
    %8 = sbr.rel target = $region3
  $region8: #{my_memory_attention.20} parent=0 // loop_exit
    _

</llo_original>
